<compile_context>
chip_gen: v7x
topology: tpu7x:2x2x1
jax: 0.10.0
libtpu: 0.0.40
codegen_flags: <defaults>
</compile_context>

<pallas_src>
import functools
import math

import numpy as np
import jax
import jax.numpy as jnp
from jax import lax
from jax.experimental import pallas as pl
from jax.experimental.pallas import tpu as pltpu


def _mdsc_kernel(xp_ref, w1_ref, w2_ref, g1_ref, b1c_ref, g2_ref, b2c_ref,
                 gmask_ref, cmask_ref, wbd_ref, pb_ref, out_ref,
                 *, K, stride, dilation, off, Ho, Wo, eps):
    """Fused multi-dilation depthwise-separable conv (single VMEM block).

    xp_ref   : (N, Hp, Wp_pad*C)   padded input, W and C flattened onto lanes
    w1_ref   : (K*K, LANE)         depthwise taps (dilation 1), tiled per column
    w2_ref   : (K*K, LANE)         depthwise taps (dilated branch)
    g1/g2    : (1, C)              BN gamma
    b1c/b2c  : (1, LANE)           BN beta, pre-broadcast to the column layout
    gmask    : (C, LANE)           0/1 mask of *kept valid* columns per channel
    cmask    : (C, LANE)           0/1 channel pattern over all columns
    wbd_ref  : (LANE, Wo*Cout)     block-diag pointwise weight (+ W subsample), bf16
    pb_ref   : (1, Wo*Cout)        pointwise bias, tiled per output column
    out_ref  : (N*Ho, Wo*Cout)     lane-dense output slab
    """
    xp = xp_ref[...]
    N = xp.shape[0]
    C, LANE = cmask_ref.shape
    hi = (Ho - 1) * stride + 1

    # hoisted loads (avoid repeated ref loads in the unrolled tap loop)
    w1 = w1_ref[...]
    w2 = w2_ref[...]
    gmask = gmask_ref[...]
    cmask = cmask_ref[...]

    # --- lane shifts hoisted out of the tap loop: one unaligned lane slice per
    # unique column shift, shared across branches when the shifts coincide ---
    sh1 = [(off + v) * C for v in range(K)]            # dilation-1 branch
    sh2 = [v * dilation * C for v in range(K)]          # dilated branch
    shifted = {sc: xp[:, :, sc:sc + LANE] for sc in sorted(set(sh1 + sh2))}
    # TODO(synk): at production tile sizes slice these from xp_ref (VMEM) instead
    # of the hoisted value to bound vreg pressure.

    # --- two parallel depthwise convolutions; stride folded into the row slice ---
    acc1 = jnp.zeros((N, Ho, LANE), jnp.float32)
    acc2 = jnp.zeros((N, Ho, LANE), jnp.float32)
    for u in range(K):
        r1, r2 = off + u, u * dilation
        for v in range(K):
            t = u * K + v
            x1, x2 = shifted[sh1[v]], shifted[sh2[v]]
            if stride == 1:
                acc1 = acc1 + x1[:, r1:r1 + Ho, :] * w1[t]
                acc2 = acc2 + x2[:, r2:r2 + Ho, :] * w2[t]
            else:
                acc1 = acc1 + x1[:, r1:r1 + hi:stride, :] * w1[t]
                acc2 = acc2 + x2[:, r2:r2 + hi:stride, :] * w2[t]

    # --- training-mode BatchNorm (centered two-pass batch stats) + ReLU ---
    # Exact f32: masked lane-reductions per channel + VPU channel broadcasts.
    # No MXU helper matmuls on this path any more.
    inv_p = 1.0 / float(N * Ho * Wo)

    def bn_relu(acc, g, b_cols):
        col_s = jnp.sum(jnp.sum(acc, axis=0), axis=0, keepdims=True)        # (1, LANE)
        mean_c = jnp.zeros((1, LANE), jnp.float32)
        for c in range(C):
            m = jnp.sum(col_s * gmask[c:c + 1, :], axis=1, keepdims=True) * inv_p
            mean_c = mean_c + m * cmask[c:c + 1, :]
        d = acc - mean_c                                                     # centered
        col_q = jnp.sum(jnp.sum(d * d, axis=0), axis=0, keepdims=True)      # (1, LANE)
        scale_c = jnp.zeros((1, LANE), jnp.float32)
        for c in range(C):
            var_c = jnp.sum(col_q * gmask[c:c + 1, :], axis=1, keepdims=True) * inv_p
            scale_c = scale_c + (g[:, c:c + 1] * lax.rsqrt(var_c + eps)) * cmask[c:c + 1, :]
        return jnp.maximum(d * scale_c + b_cols, 0.0)

    act = (bn_relu(acc1, g1_ref[...], b1c_ref[...])
           + bn_relu(acc2, g2_ref[...], b2c_ref[...]))

    # --- pointwise 1x1 conv: ONE fused lane-dense bf16 MXU matmul for all images ---
    # (reshape of leading dims is free; the bf16 cast is the last op of the BN path)
    sb = act.reshape(N * Ho, LANE).astype(jnp.bfloat16)
    out_ref[...] = (jnp.dot(sb, wbd_ref[...], preferred_element_type=jnp.float32)
                    + pb_ref[...])


def multi_dilation_separable_conv2d(x_nchw, params, *, kernel_size, stride=1,
                                    padding=0, dilation=1, eps=1e-3):
    """Wrapper: NCHW in, NCHW out (matches the PyTorch module)."""
    w1, w2, g1, b1, g2, b2, pw, pb = params
    N, C, H, W = x_nchw.shape
    K = kernel_size
    p1 = padding
    p2 = padding + (dilation - 1) * (K - 1) // 2
    off = p2 - p1
    # both branches share the same full-resolution (stride-1) output grid
    Hf = H + 2 * p1 - K + 1
    Wf = W + 2 * p1 - K + 1
    assert Hf == H + 2 * p2 - dilation * (K - 1), \
        "kernel_size and dilation cannot both be even"
    Ho = (Hf - 1) // stride + 1
    Wo = (Wf - 1) // stride + 1
    Cout = pw.shape[0]

    # lane-dense padding of the flattened (W, C) axis: Wf_pad*C is a multiple of 128
    per = (128 * C // math.gcd(128, C)) // C             # columns per 128-lane block
    Wf_pad = ((Wf + per - 1) // per) * per
    LANE = Wf_pad * C
    max_shift = max(off + K - 1, (K - 1) * dilation)     # in columns
    Wp = W + 2 * p2
    Wp_pad = max_shift + Wf_pad
    assert Wp_pad >= Wp
    Hp = H + 2 * p2

    # --- glue: NCHW -> (N, Hp, Wp_pad*C); ONE padded copy serves both branches ---
    x = jnp.transpose(x_nchw, (0, 2, 3, 1))                              # NHWC
    xp = jnp.pad(x, ((0, 0), (p2, p2), (p2, p2 + (Wp_pad - Wp)), (0, 0)))
    xp = xp.reshape(N, Hp, Wp_pad * C)

    # depthwise taps (C,1,K,K) -> (K*K, C), tiled over the padded output columns
    w1k = jnp.transpose(w1[:, 0], (1, 2, 0)).reshape(K * K, C)
    w2k = jnp.transpose(w2[:, 0], (1, 2, 0)).reshape(K * K, C)
    w1f = jnp.tile(w1k, (1, Wf_pad)).astype(jnp.float32)                 # (K*K, LANE)
    w2f = jnp.tile(w2k, (1, Wf_pad)).astype(jnp.float32)

    # channel masks for BN stats / broadcast (0/1 constants, built host-side)
    ch_pat = np.tile(np.eye(C, dtype=np.float32), (1, Wf_pad))           # (C, LANE)
    keptw = np.zeros((Wf_pad,), np.float32)
    keptw[np.arange(Wo) * stride] = 1.0                                  # kept valid cols
    gmask = jnp.asarray(ch_pat * np.repeat(keptw, C)[None, :])           # (C, LANE)
    cmask = jnp.asarray(ch_pat)                                          # (C, LANE)

    # block-diagonal pointwise weight: folds the 1x1 conv AND the W subsample,
    # zero rows for the padded columns; bf16 to halve MXU operand traffic.
    sel = np.zeros((Wf_pad, Wo), np.float32)
    sel[np.arange(Wo) * stride, np.arange(Wo)] = 1.0
    pwk = jnp.transpose(pw[:, :, 0, 0], (1, 0))                          # (C, Cout)
    wbd = jnp.kron(jnp.asarray(sel), pwk).astype(jnp.bfloat16)           # (LANE, Wo*Cout)
    pb_row = jnp.tile(pb.reshape(1, Cout), (1, Wo)).astype(jnp.float32)  # (1, Wo*Cout)

    g1k = g1.reshape(1, C).astype(jnp.float32)
    g2k = g2.reshape(1, C).astype(jnp.float32)
    b1c = jnp.tile(b1.reshape(1, C), (1, Wf_pad)).astype(jnp.float32)    # (1, LANE)
    b2c = jnp.tile(b2.reshape(1, C), (1, Wf_pad)).astype(jnp.float32)

    kernel = functools.partial(_mdsc_kernel, K=K, stride=stride, dilation=dilation,
                               off=off, Ho=Ho, Wo=Wo, eps=eps)

    operands = (xp, w1f, w2f, g1k, b1c, g2k, b2c, gmask, cmask, wbd, pb_row)

    # vmem limit derived from the actual block sizes (+ headroom for the shifted
    # copies / accumulators / BN temps), capped at v7x-physical 64 MiB.
    out_bytes = N * Ho * Wo * Cout * 4
    io_bytes = sum(int(np.prod(a.shape)) * a.dtype.itemsize for a in operands) + out_bytes
    vmem_limit = int(min(64 * 1024 * 1024, max(16 * 1024 * 1024, 16 * io_bytes)))

    # Demo shapes are tiny -> single VMEM-resident block (no grid needed).
    vmem = pl.BlockSpec(memory_space=pltpu.MemorySpace.VMEM)
    out_flat = pl.pallas_call(
        kernel,
        out_shape=jax.ShapeDtypeStruct((N * Ho, Wo * Cout), jnp.float32),
        in_specs=[vmem] * len(operands),
        out_specs=vmem,
        compiler_params=pltpu.CompilerParams(vmem_limit_bytes=vmem_limit),
    )(*operands)

    out = out_flat.reshape(N, Ho, Wo, Cout)                              # lane-dense slab
    return jnp.transpose(out, (0, 3, 1, 2))                              # back to NCHW


def reference(x, params, *, kernel_size, stride, padding, dilation, eps=1e-3):
    """Pure-JAX reference (lax convs, NCHW) mirroring the PyTorch forward."""
    w1, w2, g1, b1, g2, b2, pw, pb = params
    C = x.shape[1]
    p2 = padding + (dilation - 1) * (kernel_size - 1) // 2
    dn = ('NCHW', 'OIHW', 'NCHW')
    x1 = lax.conv_general_dilated(x, w1, (stride, stride),
                                  [(padding, padding), (padding, padding)],
                                  dimension_numbers=dn, feature_group_count=C,
                                  precision=lax.Precision.HIGHEST)
    x2 = lax.conv_general_dilated(x, w2, (stride, stride),
                                  [(p2, p2), (p2, p2)],
                                  rhs_dilation=(dilation, dilation),
                                  dimension_numbers=dn, feature_group_count=C,
                                  precision=lax.Precision.HIGHEST)

    def bn_relu(a, g, b):
        mean = a.mean(axis=(0, 2, 3), keepdims=True)
        var = ((a - mean) ** 2).mean(axis=(0, 2, 3), keepdims=True)
        y = (a - mean) * lax.rsqrt(var + eps) * g.reshape(1, -1, 1, 1) + b.reshape(1, -1, 1, 1)
        return jnp.maximum(y, 0.0)

    s = bn_relu(x1, g1, b1) + bn_relu(x2, g2, b2)
    o = lax.conv_general_dilated(s, pw, (1, 1), [(0, 0), (0, 0)],
                                 dimension_numbers=dn,
                                 precision=lax.Precision.HIGHEST)
    return o + pb.reshape(1, -1, 1, 1)


if __name__ == "__main__":
    key = jax.random.PRNGKey(0)
    ks = jax.random.split(key, 10)

    N, Cin, H, W = 2, 4, 16, 16
    Cout, K, stride, padding, dilation = 8, 3, 1, 1, 2

    x = jax.random.normal(ks[0], (N, Cin, H, W), jnp.float32)
    w1 = jax.random.normal(ks[1], (Cin, 1, K, K), jnp.float32) * 0.2
    w2 = jax.random.normal(ks[2], (Cin, 1, K, K), jnp.float32) * 0.2
    g1 = 1.0 + 0.1 * jax.random.normal(ks[3], (Cin,), jnp.float32)
    b1 = 0.1 * jax.random.normal(ks[4], (Cin,), jnp.float32)
    g2 = 1.0 + 0.1 * jax.random.normal(ks[5], (Cin,), jnp.float32)
    b2 = 0.1 * jax.random.normal(ks[6], (Cin,), jnp.float32)
    pw = jax.random.normal(ks[7], (Cout, Cin, 1, 1), jnp.float32) * 0.3
    pb = 0.1 * jax.random.normal(ks[8], (Cout,), jnp.float32)
    params = (w1, w2, g1, b1, g2, b2, pw, pb)

    out = multi_dilation_separable_conv2d(
        x, params, kernel_size=K, stride=stride, padding=padding, dilation=dilation)
    out = jax.block_until_ready(out)

    ref = reference(x, params, kernel_size=K, stride=stride, padding=padding,
                    dilation=dilation)
    # Tolerance covers the single-pass bf16 MXU rounding of the pointwise matmul
    # (BN statistics are exact f32; use a higher-precision dot if tighter parity
    # with the f32 PyTorch forward is required).
    np.testing.assert_allclose(np.asarray(out), np.asarray(ref),
                               rtol=1e-2, atol=1e-2)
    print("KERNEL_OK")
</pallas_src>

<mosaic_0001>
module attributes {stable_mosaic.version = 11 : i64} {
  func.func @_mdsc_kernel(%arg0: memref<2x20x144xf32, #tpu.memory_space<vmem>>, %arg1: memref<9x128xf32, #tpu.memory_space<vmem>>, %arg2: memref<9x128xf32, #tpu.memory_space<vmem>>, %arg3: memref<1x4xf32, #tpu.memory_space<vmem>>, %arg4: memref<1x128xf32, #tpu.memory_space<vmem>>, %arg5: memref<1x4xf32, #tpu.memory_space<vmem>>, %arg6: memref<1x128xf32, #tpu.memory_space<vmem>>, %arg7: memref<4x128xf32, #tpu.memory_space<vmem>>, %arg8: memref<4x128xf32, #tpu.memory_space<vmem>>, %arg9: memref<128x128xbf16, #tpu.memory_space<vmem>>, %arg10: memref<1x128xf32, #tpu.memory_space<vmem>>, %arg11: memref<32x128xf32, #tpu.memory_space<vmem>>) attributes {dimension_semantics = [], scalar_prefetch = 0 : i64, scratch_operands = 0 : i64, tpu.core_type = #tpu.core_type<tc>} {
    %c0 = arith.constant 0 : index
    %c0_0 = arith.constant 0 : index
    %c0_1 = arith.constant 0 : index
    %0 = vector.load %arg0[%c0, %c0_0, %c0_1] : memref<2x20x144xf32, #tpu.memory_space<vmem>>, vector<2x20x144xf32>
    %c0_2 = arith.constant 0 : index
    %c0_3 = arith.constant 0 : index
    %1 = vector.load %arg1[%c0_2, %c0_3] : memref<9x128xf32, #tpu.memory_space<vmem>>, vector<9x128xf32>
    %c0_4 = arith.constant 0 : index
    %c0_5 = arith.constant 0 : index
    %2 = vector.load %arg2[%c0_4, %c0_5] : memref<9x128xf32, #tpu.memory_space<vmem>>, vector<9x128xf32>
    %c0_6 = arith.constant 0 : index
    %c0_7 = arith.constant 0 : index
    %3 = vector.load %arg7[%c0_6, %c0_7] : memref<4x128xf32, #tpu.memory_space<vmem>>, vector<4x128xf32>
    %c0_8 = arith.constant 0 : index
    %c0_9 = arith.constant 0 : index
    %4 = vector.load %arg8[%c0_8, %c0_9] : memref<4x128xf32, #tpu.memory_space<vmem>>, vector<4x128xf32>
    %5 = vector.extract_strided_slice %0 {offsets = [0, 0, 0], sizes = [2, 20, 128], strides = [1, 1, 1]} : vector<2x20x144xf32> to vector<2x20x128xf32>
    %6 = vector.extract_strided_slice %0 {offsets = [0, 0, 4], sizes = [2, 20, 128], strides = [1, 1, 1]} : vector<2x20x144xf32> to vector<2x20x128xf32>
    %7 = vector.extract_strided_slice %0 {offsets = [0, 0, 8], sizes = [2, 20, 128], strides = [1, 1, 1]} : vector<2x20x144xf32> to vector<2x20x128xf32>
    %8 = vector.extract_strided_slice %0 {offsets = [0, 0, 12], sizes = [2, 20, 128], strides = [1, 1, 1]} : vector<2x20x144xf32> to vector<2x20x128xf32>
    %9 = vector.extract_strided_slice %0 {offsets = [0, 0, 16], sizes = [2, 20, 128], strides = [1, 1, 1]} : vector<2x20x144xf32> to vector<2x20x128xf32>
    %cst = arith.constant 0.000000e+00 : f32
    %10 = vector.broadcast %cst : f32 to vector<2x16x128xf32>
    %cst_10 = arith.constant 0.000000e+00 : f32
    %11 = vector.broadcast %cst_10 : f32 to vector<2x16x128xf32>
    %12 = vector.extract_strided_slice %6 {offsets = [0, 1, 0], sizes = [2, 16, 128], strides = [1, 1, 1]} : vector<2x20x128xf32> to vector<2x16x128xf32>
    %13 = vector.extract_strided_slice %1 {offsets = [0, 0], sizes = [1, 128], strides = [1, 1]} : vector<9x128xf32> to vector<1x128xf32>
    %14 = vector.shape_cast %13 : vector<1x128xf32> to vector<128xf32>
    %15 = vector.shape_cast %14 : vector<128xf32> to vector<1x1x128xf32>
    %16 = vector.broadcast %15 : vector<1x1x128xf32> to vector<2x16x128xf32>
    %17 = arith.mulf %12, %16 : vector<2x16x128xf32>
    %18 = arith.addf %10, %17 : vector<2x16x128xf32>
    %19 = vector.extract_strided_slice %5 {offsets = [0, 0, 0], sizes = [2, 16, 128], strides = [1, 1, 1]} : vector<2x20x128xf32> to vector<2x16x128xf32>
    %20 = vector.extract_strided_slice %2 {offsets = [0, 0], sizes = [1, 128], strides = [1, 1]} : vector<9x128xf32> to vector<1x128xf32>
    %21 = vector.shape_cast %20 : vector<1x128xf32> to vector<128xf32>
    %22 = vector.shape_cast %21 : vector<128xf32> to vector<1x1x128xf32>
    %23 = vector.broadcast %22 : vector<1x1x128xf32> to vector<2x16x128xf32>
    %24 = arith.mulf %19, %23 : vector<2x16x128xf32>
    %25 = arith.addf %11, %24 : vector<2x16x128xf32>
    %26 = vector.extract_strided_slice %7 {offsets = [0, 1, 0], sizes = [2, 16, 128], strides = [1, 1, 1]} : vector<2x20x128xf32> to vector<2x16x128xf32>
    %27 = vector.extract_strided_slice %1 {offsets = [1, 0], sizes = [1, 128], strides = [1, 1]} : vector<9x128xf32> to vector<1x128xf32>
    %28 = vector.shape_cast %27 : vector<1x128xf32> to vector<128xf32>
    %29 = vector.shape_cast %28 : vector<128xf32> to vector<1x1x128xf32>
    %30 = vector.broadcast %29 : vector<1x1x128xf32> to vector<2x16x128xf32>
    %31 = arith.mulf %26, %30 : vector<2x16x128xf32>
    %32 = arith.addf %18, %31 : vector<2x16x128xf32>
    %33 = vector.extract_strided_slice %7 {offsets = [0, 0, 0], sizes = [2, 16, 128], strides = [1, 1, 1]} : vector<2x20x128xf32> to vector<2x16x128xf32>
    %34 = vector.extract_strided_slice %2 {offsets = [1, 0], sizes = [1, 128], strides = [1, 1]} : vector<9x128xf32> to vector<1x128xf32>
    %35 = vector.shape_cast %34 : vector<1x128xf32> to vector<128xf32>
    %36 = vector.shape_cast %35 : vector<128xf32> to vector<1x1x128xf32>
    %37 = vector.broadcast %36 : vector<1x1x128xf32> to vector<2x16x128xf32>
    %38 = arith.mulf %33, %37 : vector<2x16x128xf32>
    %39 = arith.addf %25, %38 : vector<2x16x128xf32>
    %40 = vector.extract_strided_slice %8 {offsets = [0, 1, 0], sizes = [2, 16, 128], strides = [1, 1, 1]} : vector<2x20x128xf32> to vector<2x16x128xf32>
    %41 = vector.extract_strided_slice %1 {offsets = [2, 0], sizes = [1, 128], strides = [1, 1]} : vector<9x128xf32> to vector<1x128xf32>
    %42 = vector.shape_cast %41 : vector<1x128xf32> to vector<128xf32>
    %43 = vector.shape_cast %42 : vector<128xf32> to vector<1x1x128xf32>
    %44 = vector.broadcast %43 : vector<1x1x128xf32> to vector<2x16x128xf32>
    %45 = arith.mulf %40, %44 : vector<2x16x128xf32>
    %46 = arith.addf %32, %45 : vector<2x16x128xf32>
    %47 = vector.extract_strided_slice %9 {offsets = [0, 0, 0], sizes = [2, 16, 128], strides = [1, 1, 1]} : vector<2x20x128xf32> to vector<2x16x128xf32>
    %48 = vector.extract_strided_slice %2 {offsets = [2, 0], sizes = [1, 128], strides = [1, 1]} : vector<9x128xf32> to vector<1x128xf32>
    %49 = vector.shape_cast %48 : vector<1x128xf32> to vector<128xf32>
    %50 = vector.shape_cast %49 : vector<128xf32> to vector<1x1x128xf32>
    %51 = vector.broadcast %50 : vector<1x1x128xf32> to vector<2x16x128xf32>
    %52 = arith.mulf %47, %51 : vector<2x16x128xf32>
    %53 = arith.addf %39, %52 : vector<2x16x128xf32>
    %54 = vector.extract_strided_slice %6 {offsets = [0, 2, 0], sizes = [2, 16, 128], strides = [1, 1, 1]} : vector<2x20x128xf32> to vector<2x16x128xf32>
    %55 = vector.extract_strided_slice %1 {offsets = [3, 0], sizes = [1, 128], strides = [1, 1]} : vector<9x128xf32> to vector<1x128xf32>
    %56 = vector.shape_cast %55 : vector<1x128xf32> to vector<128xf32>
    %57 = vector.shape_cast %56 : vector<128xf32> to vector<1x1x128xf32>
    %58 = vector.broadcast %57 : vector<1x1x128xf32> to vector<2x16x128xf32>
    %59 = arith.mulf %54, %58 : vector<2x16x128xf32>
    %60 = arith.addf %46, %59 : vector<2x16x128xf32>
    %61 = vector.extract_strided_slice %5 {offsets = [0, 2, 0], sizes = [2, 16, 128], strides = [1, 1, 1]} : vector<2x20x128xf32> to vector<2x16x128xf32>
    %62 = vector.extract_strided_slice %2 {offsets = [3, 0], sizes = [1, 128], strides = [1, 1]} : vector<9x128xf32> to vector<1x128xf32>
    %63 = vector.shape_cast %62 : vector<1x128xf32> to vector<128xf32>
    %64 = vector.shape_cast %63 : vector<128xf32> to vector<1x1x128xf32>
    %65 = vector.broadcast %64 : vector<1x1x128xf32> to vector<2x16x128xf32>
    %66 = arith.mulf %61, %65 : vector<2x16x128xf32>
    %67 = arith.addf %53, %66 : vector<2x16x128xf32>
    %68 = vector.extract_strided_slice %7 {offsets = [0, 2, 0], sizes = [2, 16, 128], strides = [1, 1, 1]} : vector<2x20x128xf32> to vector<2x16x128xf32>
    %69 = vector.extract_strided_slice %1 {offsets = [4, 0], sizes = [1, 128], strides = [1, 1]} : vector<9x128xf32> to vector<1x128xf32>
    %70 = vector.shape_cast %69 : vector<1x128xf32> to vector<128xf32>
    %71 = vector.shape_cast %70 : vector<128xf32> to vector<1x1x128xf32>
    %72 = vector.broadcast %71 : vector<1x1x128xf32> to vector<2x16x128xf32>
    %73 = arith.mulf %68, %72 : vector<2x16x128xf32>
    %74 = arith.addf %60, %73 : vector<2x16x128xf32>
    %75 = vector.extract_strided_slice %7 {offsets = [0, 2, 0], sizes = [2, 16, 128], strides = [1, 1, 1]} : vector<2x20x128xf32> to vector<2x16x128xf32>
    %76 = vector.extract_strided_slice %2 {offsets = [4, 0], sizes = [1, 128], strides = [1, 1]} : vector<9x128xf32> to vector<1x128xf32>
    %77 = vector.shape_cast %76 : vector<1x128xf32> to vector<128xf32>
    %78 = vector.shape_cast %77 : vector<128xf32> to vector<1x1x128xf32>
    %79 = vector.broadcast %78 : vector<1x1x128xf32> to vector<2x16x128xf32>
    %80 = arith.mulf %75, %79 : vector<2x16x128xf32>
    %81 = arith.addf %67, %80 : vector<2x16x128xf32>
    %82 = vector.extract_strided_slice %8 {offsets = [0, 2, 0], sizes = [2, 16, 128], strides = [1, 1, 1]} : vector<2x20x128xf32> to vector<2x16x128xf32>
    %83 = vector.extract_strided_slice %1 {offsets = [5, 0], sizes = [1, 128], strides = [1, 1]} : vector<9x128xf32> to vector<1x128xf32>
    %84 = vector.shape_cast %83 : vector<1x128xf32> to vector<128xf32>
    %85 = vector.shape_cast %84 : vector<128xf32> to vector<1x1x128xf32>
    %86 = vector.broadcast %85 : vector<1x1x128xf32> to vector<2x16x128xf32>
    %87 = arith.mulf %82, %86 : vector<2x16x128xf32>
    %88 = arith.addf %74, %87 : vector<2x16x128xf32>
    %89 = vector.extract_strided_slice %9 {offsets = [0, 2, 0], sizes = [2, 16, 128], strides = [1, 1, 1]} : vector<2x20x128xf32> to vector<2x16x128xf32>
    %90 = vector.extract_strided_slice %2 {offsets = [5, 0], sizes = [1, 128], strides = [1, 1]} : vector<9x128xf32> to vector<1x128xf32>
    %91 = vector.shape_cast %90 : vector<1x128xf32> to vector<128xf32>
    %92 = vector.shape_cast %91 : vector<128xf32> to vector<1x1x128xf32>
    %93 = vector.broadcast %92 : vector<1x1x128xf32> to vector<2x16x128xf32>
    %94 = arith.mulf %89, %93 : vector<2x16x128xf32>
    %95 = arith.addf %81, %94 : vector<2x16x128xf32>
    %96 = vector.extract_strided_slice %6 {offsets = [0, 3, 0], sizes = [2, 16, 128], strides = [1, 1, 1]} : vector<2x20x128xf32> to vector<2x16x128xf32>
    %97 = vector.extract_strided_slice %1 {offsets = [6, 0], sizes = [1, 128], strides = [1, 1]} : vector<9x128xf32> to vector<1x128xf32>
    %98 = vector.shape_cast %97 : vector<1x128xf32> to vector<128xf32>
    %99 = vector.shape_cast %98 : vector<128xf32> to vector<1x1x128xf32>
    %100 = vector.broadcast %99 : vector<1x1x128xf32> to vector<2x16x128xf32>
    %101 = arith.mulf %96, %100 : vector<2x16x128xf32>
    %102 = arith.addf %88, %101 : vector<2x16x128xf32>
    %103 = vector.extract_strided_slice %5 {offsets = [0, 4, 0], sizes = [2, 16, 128], strides = [1, 1, 1]} : vector<2x20x128xf32> to vector<2x16x128xf32>
    %104 = vector.extract_strided_slice %2 {offsets = [6, 0], sizes = [1, 128], strides = [1, 1]} : vector<9x128xf32> to vector<1x128xf32>
    %105 = vector.shape_cast %104 : vector<1x128xf32> to vector<128xf32>
    %106 = vector.shape_cast %105 : vector<128xf32> to vector<1x1x128xf32>
    %107 = vector.broadcast %106 : vector<1x1x128xf32> to vector<2x16x128xf32>
    %108 = arith.mulf %103, %107 : vector<2x16x128xf32>
    %109 = arith.addf %95, %108 : vector<2x16x128xf32>
    %110 = vector.extract_strided_slice %7 {offsets = [0, 3, 0], sizes = [2, 16, 128], strides = [1, 1, 1]} : vector<2x20x128xf32> to vector<2x16x128xf32>
    %111 = vector.extract_strided_slice %1 {offsets = [7, 0], sizes = [1, 128], strides = [1, 1]} : vector<9x128xf32> to vector<1x128xf32>
    %112 = vector.shape_cast %111 : vector<1x128xf32> to vector<128xf32>
    %113 = vector.shape_cast %112 : vector<128xf32> to vector<1x1x128xf32>
    %114 = vector.broadcast %113 : vector<1x1x128xf32> to vector<2x16x128xf32>
    %115 = arith.mulf %110, %114 : vector<2x16x128xf32>
    %116 = arith.addf %102, %115 : vector<2x16x128xf32>
    %117 = vector.extract_strided_slice %7 {offsets = [0, 4, 0], sizes = [2, 16, 128], strides = [1, 1, 1]} : vector<2x20x128xf32> to vector<2x16x128xf32>
    %118 = vector.extract_strided_slice %2 {offsets = [7, 0], sizes = [1, 128], strides = [1, 1]} : vector<9x128xf32> to vector<1x128xf32>
    %119 = vector.shape_cast %118 : vector<1x128xf32> to vector<128xf32>
    %120 = vector.shape_cast %119 : vector<128xf32> to vector<1x1x128xf32>
    %121 = vector.broadcast %120 : vector<1x1x128xf32> to vector<2x16x128xf32>
    %122 = arith.mulf %117, %121 : vector<2x16x128xf32>
    %123 = arith.addf %109, %122 : vector<2x16x128xf32>
    %124 = vector.extract_strided_slice %8 {offsets = [0, 3, 0], sizes = [2, 16, 128], strides = [1, 1, 1]} : vector<2x20x128xf32> to vector<2x16x128xf32>
    %125 = vector.extract_strided_slice %1 {offsets = [8, 0], sizes = [1, 128], strides = [1, 1]} : vector<9x128xf32> to vector<1x128xf32>
    %126 = vector.shape_cast %125 : vector<1x128xf32> to vector<128xf32>
    %127 = vector.shape_cast %126 : vector<128xf32> to vector<1x1x128xf32>
    %128 = vector.broadcast %127 : vector<1x1x128xf32> to vector<2x16x128xf32>
    %129 = arith.mulf %124, %128 : vector<2x16x128xf32>
    %130 = arith.addf %116, %129 : vector<2x16x128xf32>
    %131 = vector.extract_strided_slice %9 {offsets = [0, 4, 0], sizes = [2, 16, 128], strides = [1, 1, 1]} : vector<2x20x128xf32> to vector<2x16x128xf32>
    %132 = vector.extract_strided_slice %2 {offsets = [8, 0], sizes = [1, 128], strides = [1, 1]} : vector<9x128xf32> to vector<1x128xf32>
    %133 = vector.shape_cast %132 : vector<1x128xf32> to vector<128xf32>
    %134 = vector.shape_cast %133 : vector<128xf32> to vector<1x1x128xf32>
    %135 = vector.broadcast %134 : vector<1x1x128xf32> to vector<2x16x128xf32>
    %136 = arith.mulf %131, %135 : vector<2x16x128xf32>
    %137 = arith.addf %123, %136 : vector<2x16x128xf32>
    %c0_11 = arith.constant 0 : index
    %c0_12 = arith.constant 0 : index
    %138 = vector.load %arg3[%c0_11, %c0_12] : memref<1x4xf32, #tpu.memory_space<vmem>>, vector<1x4xf32>
    %c0_13 = arith.constant 0 : index
    %c0_14 = arith.constant 0 : index
    %139 = vector.load %arg4[%c0_13, %c0_14] : memref<1x128xf32, #tpu.memory_space<vmem>>, vector<1x128xf32>
    %cst_15 = arith.constant dense<0.000000e+00> : vector<16x128xf32>
    %140 = vector.multi_reduction <add>, %130, %cst_15 [0] : vector<2x16x128xf32> to vector<16x128xf32>
    %cst_16 = arith.constant dense<0.000000e+00> : vector<128xf32>
    %141 = vector.multi_reduction <add>, %140, %cst_16 [0] : vector<16x128xf32> to vector<128xf32>
    %142 = vector.shape_cast %141 : vector<128xf32> to vector<1x128xf32>
    %cst_17 = arith.constant 0.000000e+00 : f32
    %143 = vector.broadcast %cst_17 : f32 to vector<1x128xf32>
    %144 = vector.extract_strided_slice %3 {offsets = [0, 0], sizes = [1, 128], strides = [1, 1]} : vector<4x128xf32> to vector<1x128xf32>
    %145 = arith.mulf %142, %144 : vector<1x128xf32>
    %cst_18 = arith.constant dense<0.000000e+00> : vector<1xf32>
    %146 = vector.multi_reduction <add>, %145, %cst_18 [1] : vector<1x128xf32> to vector<1xf32>
    %147 = vector.shape_cast %146 : vector<1xf32> to vector<1x1xf32>
    %cst_19 = arith.constant 0.001953125 : f32
    %148 = vector.broadcast %cst_19 : f32 to vector<1x1xf32>
    %149 = arith.mulf %147, %148 : vector<1x1xf32>
    %150 = vector.extract_strided_slice %4 {offsets = [0, 0], sizes = [1, 128], strides = [1, 1]} : vector<4x128xf32> to vector<1x128xf32>
    %151 = vector.broadcast %149 : vector<1x1xf32> to vector<1x128xf32>
    %152 = arith.mulf %151, %150 : vector<1x128xf32>
    %153 = arith.addf %143, %152 : vector<1x128xf32>
    %154 = vector.extract_strided_slice %3 {offsets = [1, 0], sizes = [1, 128], strides = [1, 1]} : vector<4x128xf32> to vector<1x128xf32>
    %155 = arith.mulf %142, %154 : vector<1x128xf32>
    %cst_20 = arith.constant dense<0.000000e+00> : vector<1xf32>
    %156 = vector.multi_reduction <add>, %155, %cst_20 [1] : vector<1x128xf32> to vector<1xf32>
    %157 = vector.shape_cast %156 : vector<1xf32> to vector<1x1xf32>
    %cst_21 = arith.constant 0.001953125 : f32
    %158 = vector.broadcast %cst_21 : f32 to vector<1x1xf32>
    %159 = arith.mulf %157, %158 : vector<1x1xf32>
    %160 = vector.extract_strided_slice %4 {offsets = [1, 0], sizes = [1, 128], strides = [1, 1]} : vector<4x128xf32> to vector<1x128xf32>
    %161 = vector.broadcast %159 : vector<1x1xf32> to vector<1x128xf32>
    %162 = arith.mulf %161, %160 : vector<1x128xf32>
    %163 = arith.addf %153, %162 : vector<1x128xf32>
    %164 = vector.extract_strided_slice %3 {offsets = [2, 0], sizes = [1, 128], strides = [1, 1]} : vector<4x128xf32> to vector<1x128xf32>
    %165 = arith.mulf %142, %164 : vector<1x128xf32>
    %cst_22 = arith.constant dense<0.000000e+00> : vector<1xf32>
    %166 = vector.multi_reduction <add>, %165, %cst_22 [1] : vector<1x128xf32> to vector<1xf32>
    %167 = vector.shape_cast %166 : vector<1xf32> to vector<1x1xf32>
    %cst_23 = arith.constant 0.001953125 : f32
    %168 = vector.broadcast %cst_23 : f32 to vector<1x1xf32>
    %169 = arith.mulf %167, %168 : vector<1x1xf32>
    %170 = vector.extract_strided_slice %4 {offsets = [2, 0], sizes = [1, 128], strides = [1, 1]} : vector<4x128xf32> to vector<1x128xf32>
    %171 = vector.broadcast %169 : vector<1x1xf32> to vector<1x128xf32>
    %172 = arith.mulf %171, %170 : vector<1x128xf32>
    %173 = arith.addf %163, %172 : vector<1x128xf32>
    %174 = vector.extract_strided_slice %3 {offsets = [3, 0], sizes = [1, 128], strides = [1, 1]} : vector<4x128xf32> to vector<1x128xf32>
    %175 = arith.mulf %142, %174 : vector<1x128xf32>
    %cst_24 = arith.constant dense<0.000000e+00> : vector<1xf32>
    %176 = vector.multi_reduction <add>, %175, %cst_24 [1] : vector<1x128xf32> to vector<1xf32>
    %177 = vector.shape_cast %176 : vector<1xf32> to vector<1x1xf32>
    %cst_25 = arith.constant 0.001953125 : f32
    %178 = vector.broadcast %cst_25 : f32 to vector<1x1xf32>
    %179 = arith.mulf %177, %178 : vector<1x1xf32>
    %180 = vector.extract_strided_slice %4 {offsets = [3, 0], sizes = [1, 128], strides = [1, 1]} : vector<4x128xf32> to vector<1x128xf32>
    %181 = vector.broadcast %179 : vector<1x1xf32> to vector<1x128xf32>
    %182 = arith.mulf %181, %180 : vector<1x128xf32>
    %183 = arith.addf %173, %182 : vector<1x128xf32>
    %184 = vector.shape_cast %183 : vector<1x128xf32> to vector<1x1x128xf32>
    %185 = vector.broadcast %184 : vector<1x1x128xf32> to vector<2x16x128xf32>
    %186 = arith.subf %130, %185 : vector<2x16x128xf32>
    %187 = arith.mulf %186, %186 : vector<2x16x128xf32>
    %cst_26 = arith.constant dense<0.000000e+00> : vector<16x128xf32>
    %188 = vector.multi_reduction <add>, %187, %cst_26 [0] : vector<2x16x128xf32> to vector<16x128xf32>
    %cst_27 = arith.constant dense<0.000000e+00> : vector<128xf32>
    %189 = vector.multi_reduction <add>, %188, %cst_27 [0] : vector<16x128xf32> to vector<128xf32>
    %190 = vector.shape_cast %189 : vector<128xf32> to vector<1x128xf32>
    %cst_28 = arith.constant 0.000000e+00 : f32
    %191 = vector.broadcast %cst_28 : f32 to vector<1x128xf32>
    %192 = vector.extract_strided_slice %3 {offsets = [0, 0], sizes = [1, 128], strides = [1, 1]} : vector<4x128xf32> to vector<1x128xf32>
    %193 = arith.mulf %190, %192 : vector<1x128xf32>
    %cst_29 = arith.constant dense<0.000000e+00> : vector<1xf32>
    %194 = vector.multi_reduction <add>, %193, %cst_29 [1] : vector<1x128xf32> to vector<1xf32>
    %195 = vector.shape_cast %194 : vector<1xf32> to vector<1x1xf32>
    %cst_30 = arith.constant 0.001953125 : f32
    %196 = vector.broadcast %cst_30 : f32 to vector<1x1xf32>
    %197 = arith.mulf %195, %196 : vector<1x1xf32>
    %198 = vector.extract_strided_slice %138 {offsets = [0, 0], sizes = [1, 1], strides = [1, 1]} : vector<1x4xf32> to vector<1x1xf32>
    %cst_31 = arith.constant 1.000000e-03 : f32
    %199 = vector.broadcast %cst_31 : f32 to vector<1x1xf32>
    %200 = arith.addf %197, %199 : vector<1x1xf32>
    %201 = math.rsqrt %200 : vector<1x1xf32>
    %202 = arith.mulf %198, %201 : vector<1x1xf32>
    %203 = vector.extract_strided_slice %4 {offsets = [0, 0], sizes = [1, 128], strides = [1, 1]} : vector<4x128xf32> to vector<1x128xf32>
    %204 = vector.broadcast %202 : vector<1x1xf32> to vector<1x128xf32>
    %205 = arith.mulf %204, %203 : vector<1x128xf32>
    %206 = arith.addf %191, %205 : vector<1x128xf32>
    %207 = vector.extract_strided_slice %3 {offsets = [1, 0], sizes = [1, 128], strides = [1, 1]} : vector<4x128xf32> to vector<1x128xf32>
    %208 = arith.mulf %190, %207 : vector<1x128xf32>
    %cst_32 = arith.constant dense<0.000000e+00> : vector<1xf32>
    %209 = vector.multi_reduction <add>, %208, %cst_32 [1] : vector<1x128xf32> to vector<1xf32>
    %210 = vector.shape_cast %209 : vector<1xf32> to vector<1x1xf32>
    %cst_33 = arith.constant 0.001953125 : f32
    %211 = vector.broadcast %cst_33 : f32 to vector<1x1xf32>
    %212 = arith.mulf %210, %211 : vector<1x1xf32>
    %213 = vector.extract_strided_slice %138 {offsets = [0, 1], sizes = [1, 1], strides = [1, 1]} : vector<1x4xf32> to vector<1x1xf32>
    %cst_34 = arith.constant 1.000000e-03 : f32
    %214 = vector.broadcast %cst_34 : f32 to vector<1x1xf32>
    %215 = arith.addf %212, %214 : vector<1x1xf32>
    %216 = math.rsqrt %215 : vector<1x1xf32>
    %217 = arith.mulf %213, %216 : vector<1x1xf32>
    %218 = vector.extract_strided_slice %4 {offsets = [1, 0], sizes = [1, 128], strides = [1, 1]} : vector<4x128xf32> to vector<1x128xf32>
    %219 = vector.broadcast %217 : vector<1x1xf32> to vector<1x128xf32>
    %220 = arith.mulf %219, %218 : vector<1x128xf32>
    %221 = arith.addf %206, %220 : vector<1x128xf32>
    %222 = vector.extract_strided_slice %3 {offsets = [2, 0], sizes = [1, 128], strides = [1, 1]} : vector<4x128xf32> to vector<1x128xf32>
    %223 = arith.mulf %190, %222 : vector<1x128xf32>
    %cst_35 = arith.constant dense<0.000000e+00> : vector<1xf32>
    %224 = vector.multi_reduction <add>, %223, %cst_35 [1] : vector<1x128xf32> to vector<1xf32>
    %225 = vector.shape_cast %224 : vector<1xf32> to vector<1x1xf32>
    %cst_36 = arith.constant 0.001953125 : f32
    %226 = vector.broadcast %cst_36 : f32 to vector<1x1xf32>
    %227 = arith.mulf %225, %226 : vector<1x1xf32>
    %228 = vector.extract_strided_slice %138 {offsets = [0, 2], sizes = [1, 1], strides = [1, 1]} : vector<1x4xf32> to vector<1x1xf32>
    %cst_37 = arith.constant 1.000000e-03 : f32
    %229 = vector.broadcast %cst_37 : f32 to vector<1x1xf32>
    %230 = arith.addf %227, %229 : vector<1x1xf32>
    %231 = math.rsqrt %230 : vector<1x1xf32>
    %232 = arith.mulf %228, %231 : vector<1x1xf32>
    %233 = vector.extract_strided_slice %4 {offsets = [2, 0], sizes = [1, 128], strides = [1, 1]} : vector<4x128xf32> to vector<1x128xf32>
    %234 = vector.broadcast %232 : vector<1x1xf32> to vector<1x128xf32>
    %235 = arith.mulf %234, %233 : vector<1x128xf32>
    %236 = arith.addf %221, %235 : vector<1x128xf32>
    %237 = vector.extract_strided_slice %3 {offsets = [3, 0], sizes = [1, 128], strides = [1, 1]} : vector<4x128xf32> to vector<1x128xf32>
    %238 = arith.mulf %190, %237 : vector<1x128xf32>
    %cst_38 = arith.constant dense<0.000000e+00> : vector<1xf32>
    %239 = vector.multi_reduction <add>, %238, %cst_38 [1] : vector<1x128xf32> to vector<1xf32>
    %240 = vector.shape_cast %239 : vector<1xf32> to vector<1x1xf32>
    %cst_39 = arith.constant 0.001953125 : f32
    %241 = vector.broadcast %cst_39 : f32 to vector<1x1xf32>
    %242 = arith.mulf %240, %241 : vector<1x1xf32>
    %243 = vector.extract_strided_slice %138 {offsets = [0, 3], sizes = [1, 1], strides = [1, 1]} : vector<1x4xf32> to vector<1x1xf32>
    %cst_40 = arith.constant 1.000000e-03 : f32
    %244 = vector.broadcast %cst_40 : f32 to vector<1x1xf32>
    %245 = arith.addf %242, %244 : vector<1x1xf32>
    %246 = math.rsqrt %245 : vector<1x1xf32>
    %247 = arith.mulf %243, %246 : vector<1x1xf32>
    %248 = vector.extract_strided_slice %4 {offsets = [3, 0], sizes = [1, 128], strides = [1, 1]} : vector<4x128xf32> to vector<1x128xf32>
    %249 = vector.broadcast %247 : vector<1x1xf32> to vector<1x128xf32>
    %250 = arith.mulf %249, %248 : vector<1x128xf32>
    %251 = arith.addf %236, %250 : vector<1x128xf32>
    %252 = vector.shape_cast %251 : vector<1x128xf32> to vector<1x1x128xf32>
    %253 = vector.broadcast %252 : vector<1x1x128xf32> to vector<2x16x128xf32>
    %254 = arith.mulf %186, %253 : vector<2x16x128xf32>
    %255 = vector.shape_cast %139 : vector<1x128xf32> to vector<1x1x128xf32>
    %256 = vector.broadcast %255 : vector<1x1x128xf32> to vector<2x16x128xf32>
    %257 = arith.addf %254, %256 : vector<2x16x128xf32>
    %cst_41 = arith.constant 0.000000e+00 : f32
    %258 = vector.broadcast %cst_41 : f32 to vector<2x16x128xf32>
    %259 = arith.maximumf %257, %258 : vector<2x16x128xf32>
    %c0_42 = arith.constant 0 : index
    %c0_43 = arith.constant 0 : index
    %260 = vector.load %arg5[%c0_42, %c0_43] : memref<1x4xf32, #tpu.memory_space<vmem>>, vector<1x4xf32>
    %c0_44 = arith.constant 0 : index
    %c0_45 = arith.constant 0 : index
    %261 = vector.load %arg6[%c0_44, %c0_45] : memref<1x128xf32, #tpu.memory_space<vmem>>, vector<1x128xf32>
    %cst_46 = arith.constant dense<0.000000e+00> : vector<16x128xf32>
    %262 = vector.multi_reduction <add>, %137, %cst_46 [0] : vector<2x16x128xf32> to vector<16x128xf32>
    %cst_47 = arith.constant dense<0.000000e+00> : vector<128xf32>
    %263 = vector.multi_reduction <add>, %262, %cst_47 [0] : vector<16x128xf32> to vector<128xf32>
    %264 = vector.shape_cast %263 : vector<128xf32> to vector<1x128xf32>
    %cst_48 = arith.constant 0.000000e+00 : f32
    %265 = vector.broadcast %cst_48 : f32 to vector<1x128xf32>
    %266 = vector.extract_strided_slice %3 {offsets = [0, 0], sizes = [1, 128], strides = [1, 1]} : vector<4x128xf32> to vector<1x128xf32>
    %267 = arith.mulf %264, %266 : vector<1x128xf32>
    %cst_49 = arith.constant dense<0.000000e+00> : vector<1xf32>
    %268 = vector.multi_reduction <add>, %267, %cst_49 [1] : vector<1x128xf32> to vector<1xf32>
    %269 = vector.shape_cast %268 : vector<1xf32> to vector<1x1xf32>
    %cst_50 = arith.constant 0.001953125 : f32
    %270 = vector.broadcast %cst_50 : f32 to vector<1x1xf32>
    %271 = arith.mulf %269, %270 : vector<1x1xf32>
    %272 = vector.extract_strided_slice %4 {offsets = [0, 0], sizes = [1, 128], strides = [1, 1]} : vector<4x128xf32> to vector<1x128xf32>
    %273 = vector.broadcast %271 : vector<1x1xf32> to vector<1x128xf32>
    %274 = arith.mulf %273, %272 : vector<1x128xf32>
    %275 = arith.addf %265, %274 : vector<1x128xf32>
    %276 = vector.extract_strided_slice %3 {offsets = [1, 0], sizes = [1, 128], strides = [1, 1]} : vector<4x128xf32> to vector<1x128xf32>
    %277 = arith.mulf %264, %276 : vector<1x128xf32>
    %cst_51 = arith.constant dense<0.000000e+00> : vector<1xf32>
    %278 = vector.multi_reduction <add>, %277, %cst_51 [1] : vector<1x128xf32> to vector<1xf32>
    %279 = vector.shape_cast %278 : vector<1xf32> to vector<1x1xf32>
    %cst_52 = arith.constant 0.001953125 : f32
    %280 = vector.broadcast %cst_52 : f32 to vector<1x1xf32>
    %281 = arith.mulf %279, %280 : vector<1x1xf32>
    %282 = vector.extract_strided_slice %4 {offsets = [1, 0], sizes = [1, 128], strides = [1, 1]} : vector<4x128xf32> to vector<1x128xf32>
    %283 = vector.broadcast %281 : vector<1x1xf32> to vector<1x128xf32>
    %284 = arith.mulf %283, %282 : vector<1x128xf32>
    %285 = arith.addf %275, %284 : vector<1x128xf32>
    %286 = vector.extract_strided_slice %3 {offsets = [2, 0], sizes = [1, 128], strides = [1, 1]} : vector<4x128xf32> to vector<1x128xf32>
    %287 = arith.mulf %264, %286 : vector<1x128xf32>
    %cst_53 = arith.constant dense<0.000000e+00> : vector<1xf32>
    %288 = vector.multi_reduction <add>, %287, %cst_53 [1] : vector<1x128xf32> to vector<1xf32>
    %289 = vector.shape_cast %288 : vector<1xf32> to vector<1x1xf32>
    %cst_54 = arith.constant 0.001953125 : f32
    %290 = vector.broadcast %cst_54 : f32 to vector<1x1xf32>
    %291 = arith.mulf %289, %290 : vector<1x1xf32>
    %292 = vector.extract_strided_slice %4 {offsets = [2, 0], sizes = [1, 128], strides = [1, 1]} : vector<4x128xf32> to vector<1x128xf32>
    %293 = vector.broadcast %291 : vector<1x1xf32> to vector<1x128xf32>
    %294 = arith.mulf %293, %292 : vector<1x128xf32>
    %295 = arith.addf %285, %294 : vector<1x128xf32>
    %296 = vector.extract_strided_slice %3 {offsets = [3, 0], sizes = [1, 128], strides = [1, 1]} : vector<4x128xf32> to vector<1x128xf32>
    %297 = arith.mulf %264, %296 : vector<1x128xf32>
    %cst_55 = arith.constant dense<0.000000e+00> : vector<1xf32>
    %298 = vector.multi_reduction <add>, %297, %cst_55 [1] : vector<1x128xf32> to vector<1xf32>
    %299 = vector.shape_cast %298 : vector<1xf32> to vector<1x1xf32>
    %cst_56 = arith.constant 0.001953125 : f32
    %300 = vector.broadcast %cst_56 : f32 to vector<1x1xf32>
    %301 = arith.mulf %299, %300 : vector<1x1xf32>
    %302 = vector.extract_strided_slice %4 {offsets = [3, 0], sizes = [1, 128], strides = [1, 1]} : vector<4x128xf32> to vector<1x128xf32>
    %303 = vector.broadcast %301 : vector<1x1xf32> to vector<1x128xf32>
    %304 = arith.mulf %303, %302 : vector<1x128xf32>
    %305 = arith.addf %295, %304 : vector<1x128xf32>
    %306 = vector.shape_cast %305 : vector<1x128xf32> to vector<1x1x128xf32>
    %307 = vector.broadcast %306 : vector<1x1x128xf32> to vector<2x16x128xf32>
    %308 = arith.subf %137, %307 : vector<2x16x128xf32>
    %309 = arith.mulf %308, %308 : vector<2x16x128xf32>
    %cst_57 = arith.constant dense<0.000000e+00> : vector<16x128xf32>
    %310 = vector.multi_reduction <add>, %309, %cst_57 [0] : vector<2x16x128xf32> to vector<16x128xf32>
    %cst_58 = arith.constant dense<0.000000e+00> : vector<128xf32>
    %311 = vector.multi_reduction <add>, %310, %cst_58 [0] : vector<16x128xf32> to vector<128xf32>
    %312 = vector.shape_cast %311 : vector<128xf32> to vector<1x128xf32>
    %cst_59 = arith.constant 0.000000e+00 : f32
    %313 = vector.broadcast %cst_59 : f32 to vector<1x128xf32>
    %314 = vector.extract_strided_slice %3 {offsets = [0, 0], sizes = [1, 128], strides = [1, 1]} : vector<4x128xf32> to vector<1x128xf32>
    %315 = arith.mulf %312, %314 : vector<1x128xf32>
    %cst_60 = arith.constant dense<0.000000e+00> : vector<1xf32>
    %316 = vector.multi_reduction <add>, %315, %cst_60 [1] : vector<1x128xf32> to vector<1xf32>
    %317 = vector.shape_cast %316 : vector<1xf32> to vector<1x1xf32>
    %cst_61 = arith.constant 0.001953125 : f32
    %318 = vector.broadcast %cst_61 : f32 to vector<1x1xf32>
    %319 = arith.mulf %317, %318 : vector<1x1xf32>
    %320 = vector.extract_strided_slice %260 {offsets = [0, 0], sizes = [1, 1], strides = [1, 1]} : vector<1x4xf32> to vector<1x1xf32>
    %cst_62 = arith.constant 1.000000e-03 : f32
    %321 = vector.broadcast %cst_62 : f32 to vector<1x1xf32>
    %322 = arith.addf %319, %321 : vector<1x1xf32>
    %323 = math.rsqrt %322 : vector<1x1xf32>
    %324 = arith.mulf %320, %323 : vector<1x1xf32>
    %325 = vector.extract_strided_slice %4 {offsets = [0, 0], sizes = [1, 128], strides = [1, 1]} : vector<4x128xf32> to vector<1x128xf32>
    %326 = vector.broadcast %324 : vector<1x1xf32> to vector<1x128xf32>
    %327 = arith.mulf %326, %325 : vector<1x128xf32>
    %328 = arith.addf %313, %327 : vector<1x128xf32>
    %329 = vector.extract_strided_slice %3 {offsets = [1, 0], sizes = [1, 128], strides = [1, 1]} : vector<4x128xf32> to vector<1x128xf32>
    %330 = arith.mulf %312, %329 : vector<1x128xf32>
    %cst_63 = arith.constant dense<0.000000e+00> : vector<1xf32>
    %331 = vector.multi_reduction <add>, %330, %cst_63 [1] : vector<1x128xf32> to vector<1xf32>
    %332 = vector.shape_cast %331 : vector<1xf32> to vector<1x1xf32>
    %cst_64 = arith.constant 0.001953125 : f32
    %333 = vector.broadcast %cst_64 : f32 to vector<1x1xf32>
    %334 = arith.mulf %332, %333 : vector<1x1xf32>
    %335 = vector.extract_strided_slice %260 {offsets = [0, 1], sizes = [1, 1], strides = [1, 1]} : vector<1x4xf32> to vector<1x1xf32>
    %cst_65 = arith.constant 1.000000e-03 : f32
    %336 = vector.broadcast %cst_65 : f32 to vector<1x1xf32>
    %337 = arith.addf %334, %336 : vector<1x1xf32>
    %338 = math.rsqrt %337 : vector<1x1xf32>
    %339 = arith.mulf %335, %338 : vector<1x1xf32>
    %340 = vector.extract_strided_slice %4 {offsets = [1, 0], sizes = [1, 128], strides = [1, 1]} : vector<4x128xf32> to vector<1x128xf32>
    %341 = vector.broadcast %339 : vector<1x1xf32> to vector<1x128xf32>
    %342 = arith.mulf %341, %340 : vector<1x128xf32>
    %343 = arith.addf %328, %342 : vector<1x128xf32>
    %344 = vector.extract_strided_slice %3 {offsets = [2, 0], sizes = [1, 128], strides = [1, 1]} : vector<4x128xf32> to vector<1x128xf32>
    %345 = arith.mulf %312, %344 : vector<1x128xf32>
    %cst_66 = arith.constant dense<0.000000e+00> : vector<1xf32>
    %346 = vector.multi_reduction <add>, %345, %cst_66 [1] : vector<1x128xf32> to vector<1xf32>
    %347 = vector.shape_cast %346 : vector<1xf32> to vector<1x1xf32>
    %cst_67 = arith.constant 0.001953125 : f32
    %348 = vector.broadcast %cst_67 : f32 to vector<1x1xf32>
    %349 = arith.mulf %347, %348 : vector<1x1xf32>
    %350 = vector.extract_strided_slice %260 {offsets = [0, 2], sizes = [1, 1], strides = [1, 1]} : vector<1x4xf32> to vector<1x1xf32>
    %cst_68 = arith.constant 1.000000e-03 : f32
    %351 = vector.broadcast %cst_68 : f32 to vector<1x1xf32>
    %352 = arith.addf %349, %351 : vector<1x1xf32>
    %353 = math.rsqrt %352 : vector<1x1xf32>
    %354 = arith.mulf %350, %353 : vector<1x1xf32>
    %355 = vector.extract_strided_slice %4 {offsets = [2, 0], sizes = [1, 128], strides = [1, 1]} : vector<4x128xf32> to vector<1x128xf32>
    %356 = vector.broadcast %354 : vector<1x1xf32> to vector<1x128xf32>
    %357 = arith.mulf %356, %355 : vector<1x128xf32>
    %358 = arith.addf %343, %357 : vector<1x128xf32>
    %359 = vector.extract_strided_slice %3 {offsets = [3, 0], sizes = [1, 128], strides = [1, 1]} : vector<4x128xf32> to vector<1x128xf32>
    %360 = arith.mulf %312, %359 : vector<1x128xf32>
    %cst_69 = arith.constant dense<0.000000e+00> : vector<1xf32>
    %361 = vector.multi_reduction <add>, %360, %cst_69 [1] : vector<1x128xf32> to vector<1xf32>
    %362 = vector.shape_cast %361 : vector<1xf32> to vector<1x1xf32>
    %cst_70 = arith.constant 0.001953125 : f32
    %363 = vector.broadcast %cst_70 : f32 to vector<1x1xf32>
    %364 = arith.mulf %362, %363 : vector<1x1xf32>
    %365 = vector.extract_strided_slice %260 {offsets = [0, 3], sizes = [1, 1], strides = [1, 1]} : vector<1x4xf32> to vector<1x1xf32>
    %cst_71 = arith.constant 1.000000e-03 : f32
    %366 = vector.broadcast %cst_71 : f32 to vector<1x1xf32>
    %367 = arith.addf %364, %366 : vector<1x1xf32>
    %368 = math.rsqrt %367 : vector<1x1xf32>
    %369 = arith.mulf %365, %368 : vector<1x1xf32>
    %370 = vector.extract_strided_slice %4 {offsets = [3, 0], sizes = [1, 128], strides = [1, 1]} : vector<4x128xf32> to vector<1x128xf32>
    %371 = vector.broadcast %369 : vector<1x1xf32> to vector<1x128xf32>
    %372 = arith.mulf %371, %370 : vector<1x128xf32>
    %373 = arith.addf %358, %372 : vector<1x128xf32>
    %374 = vector.shape_cast %373 : vector<1x128xf32> to vector<1x1x128xf32>
    %375 = vector.broadcast %374 : vector<1x1x128xf32> to vector<2x16x128xf32>
    %376 = arith.mulf %308, %375 : vector<2x16x128xf32>
    %377 = vector.shape_cast %261 : vector<1x128xf32> to vector<1x1x128xf32>
    %378 = vector.broadcast %377 : vector<1x1x128xf32> to vector<2x16x128xf32>
    %379 = arith.addf %376, %378 : vector<2x16x128xf32>
    %cst_72 = arith.constant 0.000000e+00 : f32
    %380 = vector.broadcast %cst_72 : f32 to vector<2x16x128xf32>
    %381 = arith.maximumf %379, %380 : vector<2x16x128xf32>
    %382 = arith.addf %259, %381 : vector<2x16x128xf32>
    %383 = vector.shape_cast %382 : vector<2x16x128xf32> to vector<32x128xf32>
    %384 = arith.truncf %383 : vector<32x128xf32> to vector<32x128xbf16>
    %c0_73 = arith.constant 0 : index
    %c0_74 = arith.constant 0 : index
    %385 = vector.load %arg9[%c0_73, %c0_74] : memref<128x128xbf16, #tpu.memory_space<vmem>>, vector<128x128xbf16>
    %cst_75 = arith.constant dense<0.000000e+00> : vector<32x128xf32>
    %386 = tpu.matmul %384, %385, %cst_75 {dimension_numbers = #tpu.dot_dimension_numbers<[1], [0], [0], [1], [0, 0, 1, 1], [], []>} : vector<32x128xbf16>, vector<128x128xbf16>, vector<32x128xf32> -> vector<32x128xf32>
    %c0_76 = arith.constant 0 : index
    %c0_77 = arith.constant 0 : index
    %387 = vector.load %arg10[%c0_76, %c0_77] : memref<1x128xf32, #tpu.memory_space<vmem>>, vector<1x128xf32>
    %388 = vector.broadcast %387 : vector<1x128xf32> to vector<32x128xf32>
    %389 = arith.addf %386, %388 : vector<32x128xf32>
    %c0_78 = arith.constant 0 : index
    %c0_79 = arith.constant 0 : index
    %390 = vector.load %arg11[%c0_78, %c0_79] : memref<32x128xf32, #tpu.memory_space<vmem>>, vector<32x128xf32>
    tpu.vector_store %arg11[%c0_78, %c0_79], %389 {strides = array<i32>} : memref<32x128xf32, #tpu.memory_space<vmem>>, vector<32x128xf32>,
    return
  }
}

</mosaic_0001>

<llo_original>
// kernel: tpu_custom_call.1
$region0: #{tpu_custom_call.1}
  #allocation0 [shape = 'u32[]', space=smem, size = 0x4, offset = 0x4, fixed_abs, tag = 'smem constant byte address 0x4 - core index']
  #allocation1 [shape = 'u32[144,128]{1,0:T(1,128)}', space=vmem, size = 0x12000, scoped, tag = 'internal scratch']
  %s0 = inlined_call_operand.vmem [shape: f32[2,20,144], index: 0, kind: input, shape index: {}]
  %s1 = inlined_call_operand.vmem [shape: f32[9,128], index: 1, kind: input, shape index: {}]
  %s2 = inlined_call_operand.vmem [shape: f32[9,128], index: 2, kind: input, shape index: {}]
  %s3 = inlined_call_operand.vmem [shape: f32[1,4], index: 3, kind: input, shape index: {}]
  %s4 = inlined_call_operand.vmem [shape: f32[1,128], index: 4, kind: input, shape index: {}]
  %s5 = inlined_call_operand.vmem [shape: f32[1,4], index: 5, kind: input, shape index: {}]
  %s6 = inlined_call_operand.vmem [shape: f32[1,128], index: 6, kind: input, shape index: {}]
  %s7 = inlined_call_operand.vmem [shape: f32[4,128], index: 7, kind: input, shape index: {}]
  %s8 = inlined_call_operand.vmem [shape: f32[4,128], index: 8, kind: input, shape index: {}]
  %s9 = inlined_call_operand.vmem [shape: bf16[128,128], index: 9, kind: input, shape index: {}]
  %s10 = inlined_call_operand.vmem [shape: f32[1,128], index: 10, kind: input, shape index: {}]
  %s11 = inlined_call_operand.hbm [shape: f32[32,128], index: 11, kind: output, shape index: {}]
  %s12 = sld [smem:[#allocation0]]
  $region54: #{tpu_custom_call.1} parent=0
    _
  %s14 = ssub.s32 1, %s12
  %s15 = scalar_select 0, %s14, %s12
  $region1: #{tpu_custom_call.1} parent=0
    #allocation2 [shape = 'u8[16384]{0}', space=vmem, size = 0x4000, scoped, tag = 'output window, operand 0, single buffered']
    #allocation3 [shape = 's32[1]{0}', space=sflag, size = 0x4, scoped, tag = 'scoped memory for tpu_custom_call.1']
    %16 = vsyncpa [#allocation3], 0
    // Predicated region
    $region2: #{tpu_custom_call.1} parent=1 // pred_check
      _
    $region3: #{tpu_custom_call.1} parent=1 // pred_check_branch
      %18 = sbr.rel (0) target = $region5
    $region4: #{tpu_custom_call.1} parent=1 // pred_region
      _
    $region5: #{tpu_custom_call.1} parent=1 // pred_fallthru
      _
    // Predicated region
    $region6: #{tpu_custom_call.1} parent=1 // pred_check
      _
    $region7: #{tpu_custom_call.1} parent=1 // pred_check_branch
      %20 = sbr.rel (0) target = $region9
    $region8: #{tpu_custom_call.1} parent=1 // pred_region
      _
    $region9: #{tpu_custom_call.1} parent=1 // pred_fallthru
      _
    // Predicated region
    $region10: #{tpu_custom_call.1} parent=1 // pred_check
      _
    $region11: #{tpu_custom_call.1} parent=1 // pred_check_branch
      %22 = sbr.rel (0) target = $region13
    $region12: #{tpu_custom_call.1} parent=1 // pred_region
      _
    $region13: #{tpu_custom_call.1} parent=1 // pred_fallthru
      _
    // Predicated region
    $region14: #{tpu_custom_call.1} parent=1 // pred_check
      _
    $region15: #{tpu_custom_call.1} parent=1 // pred_check_branch
      %24 = sbr.rel (0) target = $region17
    $region16: #{tpu_custom_call.1} parent=1 // pred_region
      _
    $region17: #{tpu_custom_call.1} parent=1 // pred_fallthru
      _
    // Predicated region
    $region18: #{tpu_custom_call.1} parent=1 // pred_check
      _
    $region19: #{tpu_custom_call.1} parent=1 // pred_check_branch
      %26 = sbr.rel (0) target = $region21
    $region20: #{tpu_custom_call.1} parent=1 // pred_region
      _
    $region21: #{tpu_custom_call.1} parent=1 // pred_fallthru
      _
    // Predicated region
    $region22: #{tpu_custom_call.1} parent=1 // pred_check
      _
    $region23: #{tpu_custom_call.1} parent=1 // pred_check_branch
      %28 = sbr.rel (0) target = $region25
    $region24: #{tpu_custom_call.1} parent=1 // pred_region
      _
    $region25: #{tpu_custom_call.1} parent=1 // pred_fallthru
      _
    // Predicated region
    $region26: #{tpu_custom_call.1} parent=1 // pred_check
      _
    $region27: #{tpu_custom_call.1} parent=1 // pred_check_branch
      %30 = sbr.rel (0) target = $region29
    $region28: #{tpu_custom_call.1} parent=1 // pred_region
      _
    $region29: #{tpu_custom_call.1} parent=1 // pred_fallthru
      _
    // Predicated region
    $region30: #{tpu_custom_call.1} parent=1 // pred_check
      _
    $region31: #{tpu_custom_call.1} parent=1 // pred_check_branch
      %32 = sbr.rel (0) target = $region33
    $region32: #{tpu_custom_call.1} parent=1 // pred_region
      _
    $region33: #{tpu_custom_call.1} parent=1 // pred_fallthru
      _
    // Predicated region
    $region34: #{tpu_custom_call.1} parent=1 // pred_check
      _
    $region35: #{tpu_custom_call.1} parent=1 // pred_check_branch
      %34 = sbr.rel (0) target = $region37
    $region36: #{tpu_custom_call.1} parent=1 // pred_region
      _
    $region37: #{tpu_custom_call.1} parent=1 // pred_fallthru
      _
    // Predicated region
    $region38: #{tpu_custom_call.1} parent=1 // pred_check
      _
    $region39: #{tpu_custom_call.1} parent=1 // pred_check_branch
      %36 = sbr.rel (0) target = $region41
    $region40: #{tpu_custom_call.1} parent=1 // pred_region
      _
    $region41: #{tpu_custom_call.1} parent=1 // pred_fallthru
      _
    // Predicated region
    $region42: #{tpu_custom_call.1} parent=1 // pred_check
      _
    $region43: #{tpu_custom_call.1} parent=1 // pred_check_branch
      %38 = sbr.rel (0) target = $region45
    $region44: #{tpu_custom_call.1} parent=1 // pred_region
      _
    $region45: #{tpu_custom_call.1} parent=1 // pred_fallthru
      _
    %v40 = vld [vmem:[%s0] sm:$0xff]
    %v41 = vld [vmem:[%s0 + $0x8] sm:$0xff]
    %v42 = vld [vmem:[%s0 + $0x10] sm:$0xff]
    %v43 = vld [vmem:[%s0 + $0x18] sm:$0xff]
    %v44 = vld [vmem:[%s0 + $0x20] sm:$0xf]
    %v45 = vld [vmem:[%s0 + $0x28] sm:$0xf]
    %v46 = vld [vmem:[%s0 + $0x30] sm:$0xff]
    %v47 = vld [vmem:[%s0 + $0x38] sm:$0xff]
    %v48 = vld [vmem:[%s0 + $0x40] sm:$0xff]
    %v49 = vld [vmem:[%s0 + $0x48] sm:$0xff]
    %v50 = vld [vmem:[%s0 + $0x50] sm:$0xf]
    %v51 = vld [vmem:[%s0 + $0x58] sm:$0xf]
    %v52 = vld [vmem:[%s1] sm:$0xff]
    %v53 = vld [vmem:[%s1 + $0x8] sm:$0x1]
    %v54 = vld [vmem:[%s2] sm:$0xff]
    %v55 = vld [vmem:[%s2 + $0x8] sm:$0x1]
    %v56 = vld [vmem:[%s7] sm:$0xf]
    %v57 = vld [vmem:[%s8] sm:$0xf]
    %v58 = vlaneseq
    %v59 = vshrl.u32 %v58, 7
    %v60 = vsub.s32 0, %v59
    %v61 = vrot.slane %v52, %v60
    %63 = vrot.lane.b32.xlu0 %v61, 4
    %v64 = vpop.permute.xlu0 %63
    %v66 = vmul.f32 %v40, %v64
    %v67 = vmul.f32 %v41, %v64
    %v68 = vmul.f32 %v42, %v64
    %v69 = vmul.f32 %v43, %v64
    %v70 = vmul.f32 %v44, %v64
    %v71 = vmul.f32 %v45, %v64
    %v72 = vmul.f32 %v46, %v64
    %v73 = vmul.f32 %v47, %v64
    %v74 = vmul.f32 %v48, %v64
    %v75 = vmul.f32 %v49, %v64
    %v76 = vmul.f32 %v50, %v64
    %v77 = vmul.f32 %v51, %v64
    %v78 = vadd.f32 %v66, 0.0
    %v79 = vadd.f32 %v67, 0.0
    %v80 = vadd.f32 %v68, 0.0
    %v81 = vadd.f32 %v69, 0.0
    %v82 = vadd.f32 %v70, 0.0
    %v83 = vadd.f32 %v71, 0.0
    %v84 = vadd.f32 %v72, 0.0
    %v85 = vadd.f32 %v73, 0.0
    %v86 = vadd.f32 %v74, 0.0
    %v87 = vadd.f32 %v75, 0.0
    %v88 = vadd.f32 %v76, 0.0
    %v89 = vadd.f32 %v77, 0.0
    %v90 = vlaneseq
    %v91 = vshrl.u32 %v90, 7
    %v92 = vsub.s32 0, %v91
    %v93 = vrot.slane %v54, %v92
    %v94 = vmul.f32 %v40, %v93
    %v95 = vmul.f32 %v42, %v93
    %v96 = vmul.f32 %v46, %v93
    %v97 = vmul.f32 %v48, %v93
    %v98 = vadd.f32 %v94, 0.0
    %v99 = vadd.f32 %v95, 0.0
    %v100 = vadd.f32 %v96, 0.0
    %v101 = vadd.f32 %v97, 0.0
    %v102 = vlaneseq
    %v103 = vshrl.u32 %v102, 7
    %v104 = vsub.s32 1, %v103
    %v105 = vrot.slane %v52, %v104
    %107 = vrot.lane.b32.xlu0 %v105, 8
    %v108 = vpop.permute.xlu0 %107
    %v110 = vmul.f32 %v40, %v108
    %v111 = vmul.f32 %v41, %v108
    %v112 = vmul.f32 %v42, %v108
    %v113 = vmul.f32 %v43, %v108
    %v114 = vmul.f32 %v44, %v108
    %v115 = vmul.f32 %v45, %v108
    %v116 = vmul.f32 %v46, %v108
    %v117 = vmul.f32 %v47, %v108
    %v118 = vmul.f32 %v48, %v108
    %v119 = vmul.f32 %v49, %v108
    %v120 = vmul.f32 %v50, %v108
    %v121 = vmul.f32 %v51, %v108
    %134 = vrot.lane.b32.xlu0 %v110, 124
    %v135 = vpop.permute.xlu0 %134
    %136 = vrot.lane.b32.xlu0 %v111, 124
    %v137 = vpop.permute.xlu0 %136
    %138 = vrot.lane.b32.xlu0 %v112, 124
    %v139 = vpop.permute.xlu0 %138
    %140 = vrot.lane.b32.xlu0 %v113, 124
    %v141 = vpop.permute.xlu0 %140
    %142 = vrot.lane.b32.xlu0 %v114, 124
    %v143 = vpop.permute.xlu0 %142
    %144 = vrot.lane.b32.xlu0 %v115, 124
    %v145 = vpop.permute.xlu0 %144
    %146 = vrot.lane.b32.xlu0 %v116, 124
    %v147 = vpop.permute.xlu0 %146
    %148 = vrot.lane.b32.xlu0 %v117, 124
    %v149 = vpop.permute.xlu0 %148
    %150 = vrot.lane.b32.xlu0 %v118, 124
    %v151 = vpop.permute.xlu0 %150
    %152 = vrot.lane.b32.xlu0 %v119, 124
    %v153 = vpop.permute.xlu0 %152
    %154 = vrot.lane.b32.xlu0 %v120, 124
    %v155 = vpop.permute.xlu0 %154
    %156 = vrot.lane.b32.xlu0 %v121, 124
    %v157 = vpop.permute.xlu0 %156
    %vm158 = vcmask 1014784
    %v159 = vsel %vm158, %v135, %v137
    %v160 = vsel %vm158, %v139, %v141
    %v161 = vsel %vm158, %v143, %v145
    %v162 = vsel %vm158, %v147, %v149
    %v163 = vsel %vm158, %v151, %v153
    %v164 = vsel %vm158, %v155, %v157
    %v177 = vadd.f32 %v78, %v159
    %v178 = vadd.f32 %v79, %v137
    %v179 = vadd.f32 %v80, %v160
    %v180 = vadd.f32 %v81, %v141
    %v181 = vadd.f32 %v82, %v161
    %v182 = vadd.f32 %v83, %v145
    %v183 = vadd.f32 %v84, %v162
    %v184 = vadd.f32 %v85, %v149
    %v185 = vadd.f32 %v86, %v163
    %v186 = vadd.f32 %v87, %v153
    %v187 = vadd.f32 %v88, %v164
    %v188 = vadd.f32 %v89, %v157
    %v189 = vlaneseq
    %v190 = vshrl.u32 %v189, 7
    %v191 = vsub.s32 1, %v190
    %v192 = vrot.slane %v54, %v191
    %194 = vrot.lane.b32.xlu0 %v192, 8
    %v195 = vpop.permute.xlu0 %194
    %v197 = vmul.f32 %v40, %v195
    %v198 = vmul.f32 %v41, %v195
    %v199 = vmul.f32 %v42, %v195
    %v200 = vmul.f32 %v43, %v195
    %v201 = vmul.f32 %v46, %v195
    %v202 = vmul.f32 %v47, %v195
    %v203 = vmul.f32 %v48, %v195
    %v204 = vmul.f32 %v49, %v195
    %213 = vrot.lane.b32.xlu0 %v197, 120
    %v214 = vpop.permute.xlu0 %213
    %215 = vrot.lane.b32.xlu0 %v198, 120
    %v216 = vpop.permute.xlu0 %215
    %217 = vrot.lane.b32.xlu0 %v199, 120
    %v218 = vpop.permute.xlu0 %217
    %219 = vrot.lane.b32.xlu0 %v200, 120
    %v220 = vpop.permute.xlu0 %219
    %221 = vrot.lane.b32.xlu0 %v201, 120
    %v222 = vpop.permute.xlu0 %221
    %223 = vrot.lane.b32.xlu0 %v202, 120
    %v224 = vpop.permute.xlu0 %223
    %225 = vrot.lane.b32.xlu0 %v203, 120
    %v226 = vpop.permute.xlu0 %225
    %227 = vrot.lane.b32.xlu0 %v204, 120
    %v228 = vpop.permute.xlu0 %227
    %vm229 = vcmask 982016
    %v230 = vsel %vm229, %v214, %v216
    %v231 = vsel %vm229, %v218, %v220
    %v232 = vsel %vm229, %v222, %v224
    %v233 = vsel %vm229, %v226, %v228
    %v238 = vadd.f32 %v98, %v230
    %v239 = vadd.f32 %v99, %v231
    %v240 = vadd.f32 %v100, %v232
    %v241 = vadd.f32 %v101, %v233
    %v242 = vlaneseq
    %v243 = vshrl.u32 %v242, 7
    %v244 = vsub.s32 2, %v243
    %v245 = vrot.slane %v52, %v244
    %247 = vrot.lane.b32.xlu0 %v245, 12
    %v248 = vpop.permute.xlu0 %247
    %v250 = vmul.f32 %v40, %v248
    %v251 = vmul.f32 %v41, %v248
    %v252 = vmul.f32 %v42, %v248
    %v253 = vmul.f32 %v43, %v248
    %v254 = vmul.f32 %v44, %v248
    %v255 = vmul.f32 %v45, %v248
    %v256 = vmul.f32 %v46, %v248
    %v257 = vmul.f32 %v47, %v248
    %v258 = vmul.f32 %v48, %v248
    %v259 = vmul.f32 %v49, %v248
    %v260 = vmul.f32 %v50, %v248
    %v261 = vmul.f32 %v51, %v248
    %274 = vrot.lane.b32.xlu0 %v250, 120
    %v275 = vpop.permute.xlu0 %274
    %276 = vrot.lane.b32.xlu0 %v251, 120
    %v277 = vpop.permute.xlu0 %276
    %278 = vrot.lane.b32.xlu0 %v252, 120
    %v279 = vpop.permute.xlu0 %278
    %280 = vrot.lane.b32.xlu0 %v253, 120
    %v281 = vpop.permute.xlu0 %280
    %282 = vrot.lane.b32.xlu0 %v254, 120
    %v283 = vpop.permute.xlu0 %282
    %284 = vrot.lane.b32.xlu0 %v255, 120
    %v285 = vpop.permute.xlu0 %284
    %286 = vrot.lane.b32.xlu0 %v256, 120
    %v287 = vpop.permute.xlu0 %286
    %288 = vrot.lane.b32.xlu0 %v257, 120
    %v289 = vpop.permute.xlu0 %288
    %290 = vrot.lane.b32.xlu0 %v258, 120
    %v291 = vpop.permute.xlu0 %290
    %292 = vrot.lane.b32.xlu0 %v259, 120
    %v293 = vpop.permute.xlu0 %292
    %294 = vrot.lane.b32.xlu0 %v260, 120
    %v295 = vpop.permute.xlu0 %294
    %296 = vrot.lane.b32.xlu0 %v261, 120
    %v297 = vpop.permute.xlu0 %296
    %v298 = vsel %vm229, %v275, %v277
    %v299 = vsel %vm229, %v279, %v281
    %v300 = vsel %vm229, %v283, %v285
    %v301 = vsel %vm229, %v287, %v289
    %v302 = vsel %vm229, %v291, %v293
    %v303 = vsel %vm229, %v295, %v297
    %v316 = vadd.f32 %v177, %v298
    %v317 = vadd.f32 %v178, %v277
    %v318 = vadd.f32 %v179, %v299
    %v319 = vadd.f32 %v180, %v281
    %v320 = vadd.f32 %v181, %v300
    %v321 = vadd.f32 %v182, %v285
    %v322 = vadd.f32 %v183, %v301
    %v323 = vadd.f32 %v184, %v289
    %v324 = vadd.f32 %v185, %v302
    %v325 = vadd.f32 %v186, %v293
    %v326 = vadd.f32 %v187, %v303
    %v327 = vadd.f32 %v188, %v297
    %v328 = vlaneseq
    %v329 = vshrl.u32 %v328, 7
    %v330 = vsub.s32 2, %v329
    %v331 = vrot.slane %v54, %v330
    %333 = vrot.lane.b32.xlu0 %v331, 16
    %v334 = vpop.permute.xlu0 %333
    %v336 = vmul.f32 %v40, %v334
    %v337 = vmul.f32 %v41, %v334
    %v338 = vmul.f32 %v42, %v334
    %v339 = vmul.f32 %v43, %v334
    %v340 = vmul.f32 %v46, %v334
    %v341 = vmul.f32 %v47, %v334
    %v342 = vmul.f32 %v48, %v334
    %v343 = vmul.f32 %v49, %v334
    %352 = vrot.lane.b32.xlu0 %v336, 112
    %v353 = vpop.permute.xlu0 %352
    %354 = vrot.lane.b32.xlu0 %v337, 112
    %v355 = vpop.permute.xlu0 %354
    %356 = vrot.lane.b32.xlu0 %v338, 112
    %v357 = vpop.permute.xlu0 %356
    %358 = vrot.lane.b32.xlu0 %v339, 112
    %v359 = vpop.permute.xlu0 %358
    %360 = vrot.lane.b32.xlu0 %v340, 112
    %v361 = vpop.permute.xlu0 %360
    %362 = vrot.lane.b32.xlu0 %v341, 112
    %v363 = vpop.permute.xlu0 %362
    %364 = vrot.lane.b32.xlu0 %v342, 112
    %v365 = vpop.permute.xlu0 %364
    %366 = vrot.lane.b32.xlu0 %v343, 112
    %v367 = vpop.permute.xlu0 %366
    %vm368 = vcmask 916480
    %v369 = vsel %vm368, %v353, %v355
    %v370 = vsel %vm368, %v357, %v359
    %v371 = vsel %vm368, %v361, %v363
    %v372 = vsel %vm368, %v365, %v367
    %v377 = vadd.f32 %v238, %v369
    %v378 = vadd.f32 %v239, %v370
    %v379 = vadd.f32 %v240, %v371
    %v380 = vadd.f32 %v241, %v372
    %v381 = vlaneseq
    %v382 = vshrl.u32 %v381, 7
    %v383 = vsub.s32 3, %v382
    %v384 = vrot.slane %v52, %v383
    %386 = vrot.lane.b32.xlu0 %v384, 4
    %v387 = vpop.permute.xlu0 %386
    %v389 = vmul.f32 %v40, %v387
    %v390 = vmul.f32 %v41, %v387
    %v391 = vmul.f32 %v42, %v387
    %v392 = vmul.f32 %v43, %v387
    %v393 = vmul.f32 %v44, %v387
    %v394 = vmul.f32 %v45, %v387
    %v395 = vmul.f32 %v46, %v387
    %v396 = vmul.f32 %v47, %v387
    %v397 = vmul.f32 %v48, %v387
    %v398 = vmul.f32 %v49, %v387
    %v399 = vmul.f32 %v50, %v387
    %v400 = vmul.f32 %v51, %v387
    %vm413 = vcmask 1046528
    %v414 = vrot.slane %v389, 1
    %v415 = vrot.slane %v391, 1
    %v416 = vsel %vm413, %v414, %v415
    %v417 = vrot.slane %v390, 1
    %v418 = vrot.slane %v392, 1
    %v419 = vsel %vm413, %v417, %v418
    %v420 = vrot.slane %v393, 1
    %v421 = vsel %vm413, %v415, %v420
    %v422 = vrot.slane %v394, 1
    %v423 = vsel %vm413, %v418, %v422
    %v424 = vrot.slane %v395, 1
    %v425 = vrot.slane %v397, 1
    %v426 = vsel %vm413, %v424, %v425
    %v427 = vrot.slane %v396, 1
    %v428 = vrot.slane %v398, 1
    %v429 = vsel %vm413, %v427, %v428
    %v430 = vrot.slane %v399, 1
    %v431 = vsel %vm413, %v425, %v430
    %v432 = vrot.slane %v400, 1
    %v433 = vsel %vm413, %v428, %v432
    %v446 = vadd.f32 %v316, %v416
    %v447 = vadd.f32 %v317, %v419
    %v448 = vadd.f32 %v318, %v421
    %v449 = vadd.f32 %v319, %v423
    %v450 = vadd.f32 %v320, %v420
    %v451 = vadd.f32 %v321, %v422
    %v452 = vadd.f32 %v322, %v426
    %v453 = vadd.f32 %v323, %v429
    %v454 = vadd.f32 %v324, %v431
    %v455 = vadd.f32 %v325, %v433
    %v456 = vadd.f32 %v326, %v430
    %v457 = vadd.f32 %v327, %v432
    %v458 = vlaneseq
    %v459 = vshrl.u32 %v458, 7
    %v460 = vsub.s32 3, %v459
    %v461 = vrot.slane %v54, %v460
    %v462 = vmul.f32 %v40, %v461
    %v463 = vmul.f32 %v42, %v461
    %v464 = vmul.f32 %v44, %v461
    %v465 = vmul.f32 %v46, %v461
    %v466 = vmul.f32 %v48, %v461
    %v467 = vmul.f32 %v50, %v461
    %vm474 = vcmask 1045504
    %v475 = vrot.slane %v462, 2
    %v476 = vrot.slane %v463, 2
    %v477 = vsel %vm474, %v475, %v476
    %v478 = vrot.slane %v464, 2
    %v479 = vsel %vm474, %v476, %v478
    %v480 = vrot.slane %v465, 2
    %v481 = vrot.slane %v466, 2
    %v482 = vsel %vm474, %v480, %v481
    %v483 = vrot.slane %v467, 2
    %v484 = vsel %vm474, %v481, %v483
    %v489 = vadd.f32 %v377, %v477
    %v490 = vadd.f32 %v378, %v479
    %v491 = vadd.f32 %v379, %v482
    %v492 = vadd.f32 %v380, %v484
    %v493 = vlaneseq
    %v494 = vshrl.u32 %v493, 7
    %v495 = vsub.s32 4, %v494
    %v496 = vrot.slane %v52, %v495
    %498 = vrot.lane.b32.xlu0 %v496, 8
    %v499 = vpop.permute.xlu0 %498
    %v501 = vmul.f32 %v40, %v499
    %v502 = vmul.f32 %v41, %v499
    %v503 = vmul.f32 %v42, %v499
    %v504 = vmul.f32 %v43, %v499
    %v505 = vmul.f32 %v44, %v499
    %v506 = vmul.f32 %v45, %v499
    %v507 = vmul.f32 %v46, %v499
    %v508 = vmul.f32 %v47, %v499
    %v509 = vmul.f32 %v48, %v499
    %v510 = vmul.f32 %v49, %v499
    %v511 = vmul.f32 %v50, %v499
    %v512 = vmul.f32 %v51, %v499
    %v525 = vrot.slane %v501, 1
    %v526 = vrot.slane %v503, 1
    %v527 = vsel %vm413, %v525, %v526
    %v528 = vrot.slane %v502, 1
    %v529 = vrot.slane %v504, 1
    %v530 = vsel %vm413, %v528, %v529
    %v531 = vrot.slane %v505, 1
    %v532 = vsel %vm413, %v526, %v531
    %v533 = vrot.slane %v506, 1
    %v534 = vsel %vm413, %v529, %v533
    %v535 = vrot.slane %v507, 1
    %v536 = vrot.slane %v509, 1
    %v537 = vsel %vm413, %v535, %v536
    %v538 = vrot.slane %v508, 1
    %v539 = vrot.slane %v510, 1
    %v540 = vsel %vm413, %v538, %v539
    %v541 = vrot.slane %v511, 1
    %v542 = vsel %vm413, %v536, %v541
    %v543 = vrot.slane %v512, 1
    %v544 = vsel %vm413, %v539, %v543
    %545 = vrot.lane.b32.xlu0 %v527, 124
    %v546 = vpop.permute.xlu0 %545
    %547 = vrot.lane.b32.xlu0 %v530, 124
    %v548 = vpop.permute.xlu0 %547
    %549 = vrot.lane.b32.xlu0 %v532, 124
    %v550 = vpop.permute.xlu0 %549
    %551 = vrot.lane.b32.xlu0 %v534, 124
    %v552 = vpop.permute.xlu0 %551
    %553 = vrot.lane.b32.xlu0 %v531, 124
    %v554 = vpop.permute.xlu0 %553
    %555 = vrot.lane.b32.xlu0 %v533, 124
    %v556 = vpop.permute.xlu0 %555
    %557 = vrot.lane.b32.xlu0 %v537, 124
    %v558 = vpop.permute.xlu0 %557
    %559 = vrot.lane.b32.xlu0 %v540, 124
    %v560 = vpop.permute.xlu0 %559
    %561 = vrot.lane.b32.xlu0 %v542, 124
    %v562 = vpop.permute.xlu0 %561
    %563 = vrot.lane.b32.xlu0 %v544, 124
    %v564 = vpop.permute.xlu0 %563
    %565 = vrot.lane.b32.xlu0 %v541, 124
    %v566 = vpop.permute.xlu0 %565
    %567 = vrot.lane.b32.xlu0 %v543, 124
    %v568 = vpop.permute.xlu0 %567
    %v569 = vsel %vm158, %v546, %v548
    %v570 = vsel %vm158, %v550, %v552
    %v571 = vsel %vm158, %v554, %v556
    %v572 = vsel %vm158, %v558, %v560
    %v573 = vsel %vm158, %v562, %v564
    %v574 = vsel %vm158, %v566, %v568
    %v587 = vadd.f32 %v446, %v569
    %v588 = vadd.f32 %v447, %v548
    %v589 = vadd.f32 %v448, %v570
    %v590 = vadd.f32 %v449, %v552
    %v591 = vadd.f32 %v450, %v571
    %v592 = vadd.f32 %v451, %v556
    %v593 = vadd.f32 %v452, %v572
    %v594 = vadd.f32 %v453, %v560
    %v595 = vadd.f32 %v454, %v573
    %v596 = vadd.f32 %v455, %v564
    %v597 = vadd.f32 %v456, %v574
    %v598 = vadd.f32 %v457, %v568
    %v599 = vlaneseq
    %v600 = vshrl.u32 %v599, 7
    %v601 = vsub.s32 4, %v600
    %v602 = vrot.slane %v54, %v601
    %604 = vrot.lane.b32.xlu0 %v602, 8
    %v605 = vpop.permute.xlu0 %604
    %v607 = vmul.f32 %v40, %v605
    %v608 = vmul.f32 %v41, %v605
    %v609 = vmul.f32 %v42, %v605
    %v610 = vmul.f32 %v43, %v605
    %v611 = vmul.f32 %v44, %v605
    %v612 = vmul.f32 %v45, %v605
    %v613 = vmul.f32 %v46, %v605
    %v614 = vmul.f32 %v47, %v605
    %v615 = vmul.f32 %v48, %v605
    %v616 = vmul.f32 %v49, %v605
    %v617 = vmul.f32 %v50, %v605
    %v618 = vmul.f32 %v51, %v605
    %v631 = vrot.slane %v607, 2
    %v632 = vrot.slane %v609, 2
    %v633 = vsel %vm474, %v631, %v632
    %v634 = vrot.slane %v608, 2
    %v635 = vrot.slane %v610, 2
    %v636 = vsel %vm474, %v634, %v635
    %v637 = vrot.slane %v611, 2
    %v638 = vsel %vm474, %v632, %v637
    %v639 = vrot.slane %v612, 2
    %v640 = vsel %vm474, %v635, %v639
    %v641 = vrot.slane %v613, 2
    %v642 = vrot.slane %v615, 2
    %v643 = vsel %vm474, %v641, %v642
    %v644 = vrot.slane %v614, 2
    %v645 = vrot.slane %v616, 2
    %v646 = vsel %vm474, %v644, %v645
    %v647 = vrot.slane %v617, 2
    %v648 = vsel %vm474, %v642, %v647
    %v649 = vrot.slane %v618, 2
    %v650 = vsel %vm474, %v645, %v649
    %651 = vrot.lane.b32.xlu0 %v633, 120
    %v652 = vpop.permute.xlu0 %651
    %653 = vrot.lane.b32.xlu0 %v636, 120
    %v654 = vpop.permute.xlu0 %653
    %655 = vrot.lane.b32.xlu0 %v638, 120
    %v656 = vpop.permute.xlu0 %655
    %657 = vrot.lane.b32.xlu0 %v640, 120
    %v658 = vpop.permute.xlu0 %657
    %659 = vrot.lane.b32.xlu0 %v643, 120
    %v660 = vpop.permute.xlu0 %659
    %661 = vrot.lane.b32.xlu0 %v646, 120
    %v662 = vpop.permute.xlu0 %661
    %663 = vrot.lane.b32.xlu0 %v648, 120
    %v664 = vpop.permute.xlu0 %663
    %665 = vrot.lane.b32.xlu0 %v650, 120
    %v666 = vpop.permute.xlu0 %665
    %v667 = vsel %vm229, %v652, %v654
    %v668 = vsel %vm229, %v656, %v658
    %v669 = vsel %vm229, %v660, %v662
    %v670 = vsel %vm229, %v664, %v666
    %v675 = vadd.f32 %v489, %v667
    %v676 = vadd.f32 %v490, %v668
    %v677 = vadd.f32 %v491, %v669
    %v678 = vadd.f32 %v492, %v670
    %v679 = vlaneseq
    %v680 = vshrl.u32 %v679, 7
    %v681 = vsub.s32 5, %v680
    %v682 = vrot.slane %v52, %v681
    %684 = vrot.lane.b32.xlu0 %v682, 12
    %v685 = vpop.permute.xlu0 %684
    %v687 = vmul.f32 %v40, %v685
    %v688 = vmul.f32 %v41, %v685
    %v689 = vmul.f32 %v42, %v685
    %v690 = vmul.f32 %v43, %v685
    %v691 = vmul.f32 %v44, %v685
    %v692 = vmul.f32 %v45, %v685
    %v693 = vmul.f32 %v46, %v685
    %v694 = vmul.f32 %v47, %v685
    %v695 = vmul.f32 %v48, %v685
    %v696 = vmul.f32 %v49, %v685
    %v697 = vmul.f32 %v50, %v685
    %v698 = vmul.f32 %v51, %v685
    %v711 = vrot.slane %v687, 1
    %v712 = vrot.slane %v689, 1
    %v713 = vsel %vm413, %v711, %v712
    %v714 = vrot.slane %v688, 1
    %v715 = vrot.slane %v690, 1
    %v716 = vsel %vm413, %v714, %v715
    %v717 = vrot.slane %v691, 1
    %v718 = vsel %vm413, %v712, %v717
    %v719 = vrot.slane %v692, 1
    %v720 = vsel %vm413, %v715, %v719
    %v721 = vrot.slane %v693, 1
    %v722 = vrot.slane %v695, 1
    %v723 = vsel %vm413, %v721, %v722
    %v724 = vrot.slane %v694, 1
    %v725 = vrot.slane %v696, 1
    %v726 = vsel %vm413, %v724, %v725
    %v727 = vrot.slane %v697, 1
    %v728 = vsel %vm413, %v722, %v727
    %v729 = vrot.slane %v698, 1
    %v730 = vsel %vm413, %v725, %v729
    %731 = vrot.lane.b32.xlu0 %v713, 120
    %v732 = vpop.permute.xlu0 %731
    %733 = vrot.lane.b32.xlu0 %v716, 120
    %v734 = vpop.permute.xlu0 %733
    %735 = vrot.lane.b32.xlu0 %v718, 120
    %v736 = vpop.permute.xlu0 %735
    %737 = vrot.lane.b32.xlu0 %v720, 120
    %v738 = vpop.permute.xlu0 %737
    %739 = vrot.lane.b32.xlu0 %v717, 120
    %v740 = vpop.permute.xlu0 %739
    %741 = vrot.lane.b32.xlu0 %v719, 120
    %v742 = vpop.permute.xlu0 %741
    %743 = vrot.lane.b32.xlu0 %v723, 120
    %v744 = vpop.permute.xlu0 %743
    %745 = vrot.lane.b32.xlu0 %v726, 120
    %v746 = vpop.permute.xlu0 %745
    %747 = vrot.lane.b32.xlu0 %v728, 120
    %v748 = vpop.permute.xlu0 %747
    %749 = vrot.lane.b32.xlu0 %v730, 120
    %v750 = vpop.permute.xlu0 %749
    %751 = vrot.lane.b32.xlu0 %v727, 120
    %v752 = vpop.permute.xlu0 %751
    %753 = vrot.lane.b32.xlu0 %v729, 120
    %v754 = vpop.permute.xlu0 %753
    %v755 = vsel %vm229, %v732, %v734
    %v756 = vsel %vm229, %v736, %v738
    %v757 = vsel %vm229, %v740, %v742
    %v758 = vsel %vm229, %v744, %v746
    %v759 = vsel %vm229, %v748, %v750
    %v760 = vsel %vm229, %v752, %v754
    %v773 = vadd.f32 %v587, %v755
    %v774 = vadd.f32 %v588, %v734
    %v775 = vadd.f32 %v589, %v756
    %v776 = vadd.f32 %v590, %v738
    %v777 = vadd.f32 %v591, %v757
    %v778 = vadd.f32 %v592, %v742
    %v779 = vadd.f32 %v593, %v758
    %v780 = vadd.f32 %v594, %v746
    %v781 = vadd.f32 %v595, %v759
    %v782 = vadd.f32 %v596, %v750
    %v783 = vadd.f32 %v597, %v760
    %v784 = vadd.f32 %v598, %v754
    %v785 = vlaneseq
    %v786 = vshrl.u32 %v785, 7
    %v787 = vsub.s32 5, %v786
    %v788 = vrot.slane %v54, %v787
    %790 = vrot.lane.b32.xlu0 %v788, 16
    %v791 = vpop.permute.xlu0 %790
    %v793 = vmul.f32 %v40, %v791
    %v794 = vmul.f32 %v41, %v791
    %v795 = vmul.f32 %v42, %v791
    %v796 = vmul.f32 %v43, %v791
    %v797 = vmul.f32 %v44, %v791
    %v798 = vmul.f32 %v45, %v791
    %v799 = vmul.f32 %v46, %v791
    %v800 = vmul.f32 %v47, %v791
    %v801 = vmul.f32 %v48, %v791
    %v802 = vmul.f32 %v49, %v791
    %v803 = vmul.f32 %v50, %v791
    %v804 = vmul.f32 %v51, %v791
    %v817 = vrot.slane %v793, 2
    %v818 = vrot.slane %v795, 2
    %v819 = vsel %vm474, %v817, %v818
    %v820 = vrot.slane %v794, 2
    %v821 = vrot.slane %v796, 2
    %v822 = vsel %vm474, %v820, %v821
    %v823 = vrot.slane %v797, 2
    %v824 = vsel %vm474, %v818, %v823
    %v825 = vrot.slane %v798, 2
    %v826 = vsel %vm474, %v821, %v825
    %v827 = vrot.slane %v799, 2
    %v828 = vrot.slane %v801, 2
    %v829 = vsel %vm474, %v827, %v828
    %v830 = vrot.slane %v800, 2
    %v831 = vrot.slane %v802, 2
    %v832 = vsel %vm474, %v830, %v831
    %v833 = vrot.slane %v803, 2
    %v834 = vsel %vm474, %v828, %v833
    %v835 = vrot.slane %v804, 2
    %v836 = vsel %vm474, %v831, %v835
    %837 = vrot.lane.b32.xlu0 %v819, 112
    %v838 = vpop.permute.xlu0 %837
    %839 = vrot.lane.b32.xlu0 %v822, 112
    %v840 = vpop.permute.xlu0 %839
    %841 = vrot.lane.b32.xlu0 %v824, 112
    %v842 = vpop.permute.xlu0 %841
    %843 = vrot.lane.b32.xlu0 %v826, 112
    %v844 = vpop.permute.xlu0 %843
    %845 = vrot.lane.b32.xlu0 %v829, 112
    %v846 = vpop.permute.xlu0 %845
    %847 = vrot.lane.b32.xlu0 %v832, 112
    %v848 = vpop.permute.xlu0 %847
    %849 = vrot.lane.b32.xlu0 %v834, 112
    %v850 = vpop.permute.xlu0 %849
    %851 = vrot.lane.b32.xlu0 %v836, 112
    %v852 = vpop.permute.xlu0 %851
    %v853 = vsel %vm368, %v838, %v840
    %v854 = vsel %vm368, %v842, %v844
    %v855 = vsel %vm368, %v846, %v848
    %v856 = vsel %vm368, %v850, %v852
    %v861 = vadd.f32 %v675, %v853
    %v862 = vadd.f32 %v676, %v854
    %v863 = vadd.f32 %v677, %v855
    %v864 = vadd.f32 %v678, %v856
    %v865 = vlaneseq
    %v866 = vshrl.u32 %v865, 7
    %v867 = vsub.s32 6, %v866
    %v868 = vrot.slane %v52, %v867
    %870 = vrot.lane.b32.xlu0 %v868, 4
    %v871 = vpop.permute.xlu0 %870
    %v873 = vmul.f32 %v40, %v871
    %v874 = vmul.f32 %v41, %v871
    %v875 = vmul.f32 %v42, %v871
    %v876 = vmul.f32 %v43, %v871
    %v877 = vmul.f32 %v44, %v871
    %v878 = vmul.f32 %v45, %v871
    %v879 = vmul.f32 %v46, %v871
    %v880 = vmul.f32 %v47, %v871
    %v881 = vmul.f32 %v48, %v871
    %v882 = vmul.f32 %v49, %v871
    %v883 = vmul.f32 %v50, %v871
    %v884 = vmul.f32 %v51, %v871
    %v897 = vrot.slane %v873, 2
    %v898 = vrot.slane %v875, 2
    %v899 = vsel %vm474, %v897, %v898
    %v900 = vrot.slane %v874, 2
    %v901 = vrot.slane %v876, 2
    %v902 = vsel %vm474, %v900, %v901
    %v903 = vrot.slane %v877, 2
    %v904 = vsel %vm474, %v898, %v903
    %v905 = vrot.slane %v878, 2
    %v906 = vsel %vm474, %v901, %v905
    %v907 = vrot.slane %v879, 2
    %v908 = vrot.slane %v881, 2
    %v909 = vsel %vm474, %v907, %v908
    %v910 = vrot.slane %v880, 2
    %v911 = vrot.slane %v882, 2
    %v912 = vsel %vm474, %v910, %v911
    %v913 = vrot.slane %v883, 2
    %v914 = vsel %vm474, %v908, %v913
    %v915 = vrot.slane %v884, 2
    %v916 = vsel %vm474, %v911, %v915
    %v929 = vadd.f32 %v773, %v899
    %v930 = vadd.f32 %v774, %v902
    %v931 = vadd.f32 %v775, %v904
    %v932 = vadd.f32 %v776, %v906
    %v933 = vadd.f32 %v777, %v903
    %v934 = vadd.f32 %v778, %v905
    %v935 = vadd.f32 %v779, %v909
    %v936 = vadd.f32 %v780, %v912
    %v937 = vadd.f32 %v781, %v914
    %v938 = vadd.f32 %v782, %v916
    %v939 = vadd.f32 %v783, %v913
    %v940 = vadd.f32 %v784, %v915
    %v941 = vlaneseq
    %v942 = vshrl.u32 %v941, 7
    %v943 = vsub.s32 6, %v942
    %v944 = vrot.slane %v54, %v943
    %v945 = vmul.f32 %v40, %v944
    %v946 = vmul.f32 %v42, %v944
    %v947 = vmul.f32 %v44, %v944
    %v948 = vmul.f32 %v46, %v944
    %v949 = vmul.f32 %v48, %v944
    %v950 = vmul.f32 %v50, %v944
    %vm957 = vcmask 1043456
    %v958 = vrot.slane %v945, 4
    %v959 = vrot.slane %v946, 4
    %v960 = vsel %vm957, %v958, %v959
    %v961 = vrot.slane %v947, 4
    %v962 = vsel %vm957, %v959, %v961
    %v963 = vrot.slane %v948, 4
    %v964 = vrot.slane %v949, 4
    %v965 = vsel %vm957, %v963, %v964
    %v966 = vrot.slane %v950, 4
    %v967 = vsel %vm957, %v964, %v966
    %v972 = vadd.f32 %v861, %v960
    %v973 = vadd.f32 %v862, %v962
    %v974 = vadd.f32 %v863, %v965
    %v975 = vadd.f32 %v864, %v967
    %v976 = vlaneseq
    %v977 = vshrl.u32 %v976, 7
    %v978 = vsub.s32 7, %v977
    %v979 = vrot.slane %v52, %v978
    %981 = vrot.lane.b32.xlu0 %v979, 8
    %v982 = vpop.permute.xlu0 %981
    %v984 = vmul.f32 %v40, %v982
    %v985 = vmul.f32 %v41, %v982
    %v986 = vmul.f32 %v42, %v982
    %v987 = vmul.f32 %v43, %v982
    %v988 = vmul.f32 %v44, %v982
    %v989 = vmul.f32 %v45, %v982
    %v990 = vmul.f32 %v46, %v982
    %v991 = vmul.f32 %v47, %v982
    %v992 = vmul.f32 %v48, %v982
    %v993 = vmul.f32 %v49, %v982
    %v994 = vmul.f32 %v50, %v982
    %v995 = vmul.f32 %v51, %v982
    %v1008 = vrot.slane %v984, 2
    %v1009 = vrot.slane %v986, 2
    %v1010 = vsel %vm474, %v1008, %v1009
    %v1011 = vrot.slane %v985, 2
    %v1012 = vrot.slane %v987, 2
    %v1013 = vsel %vm474, %v1011, %v1012
    %v1014 = vrot.slane %v988, 2
    %v1015 = vsel %vm474, %v1009, %v1014
    %v1016 = vrot.slane %v989, 2
    %v1017 = vsel %vm474, %v1012, %v1016
    %v1018 = vrot.slane %v990, 2
    %v1019 = vrot.slane %v992, 2
    %v1020 = vsel %vm474, %v1018, %v1019
    %v1021 = vrot.slane %v991, 2
    %v1022 = vrot.slane %v993, 2
    %v1023 = vsel %vm474, %v1021, %v1022
    %v1024 = vrot.slane %v994, 2
    %v1025 = vsel %vm474, %v1019, %v1024
    %v1026 = vrot.slane %v995, 2
    %v1027 = vsel %vm474, %v1022, %v1026
    %1028 = vrot.lane.b32.xlu0 %v1010, 124
    %v1029 = vpop.permute.xlu0 %1028
    %1030 = vrot.lane.b32.xlu0 %v1013, 124
    %v1031 = vpop.permute.xlu0 %1030
    %1032 = vrot.lane.b32.xlu0 %v1015, 124
    %v1033 = vpop.permute.xlu0 %1032
    %1034 = vrot.lane.b32.xlu0 %v1017, 124
    %v1035 = vpop.permute.xlu0 %1034
    %1036 = vrot.lane.b32.xlu0 %v1014, 124
    %v1037 = vpop.permute.xlu0 %1036
    %1038 = vrot.lane.b32.xlu0 %v1016, 124
    %v1039 = vpop.permute.xlu0 %1038
    %1040 = vrot.lane.b32.xlu0 %v1020, 124
    %v1041 = vpop.permute.xlu0 %1040
    %1042 = vrot.lane.b32.xlu0 %v1023, 124
    %v1043 = vpop.permute.xlu0 %1042
    %1044 = vrot.lane.b32.xlu0 %v1025, 124
    %v1045 = vpop.permute.xlu0 %1044
    %1046 = vrot.lane.b32.xlu0 %v1027, 124
    %v1047 = vpop.permute.xlu0 %1046
    %1048 = vrot.lane.b32.xlu0 %v1024, 124
    %v1049 = vpop.permute.xlu0 %1048
    %1050 = vrot.lane.b32.xlu0 %v1026, 124
    %v1051 = vpop.permute.xlu0 %1050
    %v1052 = vsel %vm158, %v1029, %v1031
    %v1053 = vsel %vm158, %v1033, %v1035
    %v1054 = vsel %vm158, %v1037, %v1039
    %v1055 = vsel %vm158, %v1041, %v1043
    %v1056 = vsel %vm158, %v1045, %v1047
    %v1057 = vsel %vm158, %v1049, %v1051
    %v1070 = vadd.f32 %v929, %v1052
    %v1071 = vadd.f32 %v930, %v1031
    %v1072 = vadd.f32 %v931, %v1053
    %v1073 = vadd.f32 %v932, %v1035
    %v1074 = vadd.f32 %v933, %v1054
    %v1075 = vadd.f32 %v934, %v1039
    %v1076 = vadd.f32 %v935, %v1055
    %v1077 = vadd.f32 %v936, %v1043
    %v1078 = vadd.f32 %v937, %v1056
    %v1079 = vadd.f32 %v938, %v1047
    %v1080 = vadd.f32 %v939, %v1057
    %v1081 = vadd.f32 %v940, %v1051
    %v1082 = vlaneseq
    %v1083 = vshrl.u32 %v1082, 7
    %v1084 = vsub.s32 7, %v1083
    %v1085 = vrot.slane %v54, %v1084
    %1087 = vrot.lane.b32.xlu0 %v1085, 8
    %v1088 = vpop.permute.xlu0 %1087
    %v1090 = vmul.f32 %v40, %v1088
    %v1091 = vmul.f32 %v41, %v1088
    %v1092 = vmul.f32 %v42, %v1088
    %v1093 = vmul.f32 %v43, %v1088
    %v1094 = vmul.f32 %v44, %v1088
    %v1095 = vmul.f32 %v45, %v1088
    %v1096 = vmul.f32 %v46, %v1088
    %v1097 = vmul.f32 %v47, %v1088
    %v1098 = vmul.f32 %v48, %v1088
    %v1099 = vmul.f32 %v49, %v1088
    %v1100 = vmul.f32 %v50, %v1088
    %v1101 = vmul.f32 %v51, %v1088
    %v1114 = vrot.slane %v1090, 4
    %v1115 = vrot.slane %v1092, 4
    %v1116 = vsel %vm957, %v1114, %v1115
    %v1117 = vrot.slane %v1091, 4
    %v1118 = vrot.slane %v1093, 4
    %v1119 = vsel %vm957, %v1117, %v1118
    %v1120 = vrot.slane %v1094, 4
    %v1121 = vsel %vm957, %v1115, %v1120
    %v1122 = vrot.slane %v1095, 4
    %v1123 = vsel %vm957, %v1118, %v1122
    %v1124 = vrot.slane %v1096, 4
    %v1125 = vrot.slane %v1098, 4
    %v1126 = vsel %vm957, %v1124, %v1125
    %v1127 = vrot.slane %v1097, 4
    %v1128 = vrot.slane %v1099, 4
    %v1129 = vsel %vm957, %v1127, %v1128
    %v1130 = vrot.slane %v1100, 4
    %v1131 = vsel %vm957, %v1125, %v1130
    %v1132 = vrot.slane %v1101, 4
    %v1133 = vsel %vm957, %v1128, %v1132
    %1134 = vrot.lane.b32.xlu0 %v1116, 120
    %v1135 = vpop.permute.xlu0 %1134
    %1136 = vrot.lane.b32.xlu0 %v1119, 120
    %v1137 = vpop.permute.xlu0 %1136
    %1138 = vrot.lane.b32.xlu0 %v1121, 120
    %v1139 = vpop.permute.xlu0 %1138
    %1140 = vrot.lane.b32.xlu0 %v1123, 120
    %v1141 = vpop.permute.xlu0 %1140
    %1142 = vrot.lane.b32.xlu0 %v1126, 120
    %v1143 = vpop.permute.xlu0 %1142
    %1144 = vrot.lane.b32.xlu0 %v1129, 120
    %v1145 = vpop.permute.xlu0 %1144
    %1146 = vrot.lane.b32.xlu0 %v1131, 120
    %v1147 = vpop.permute.xlu0 %1146
    %1148 = vrot.lane.b32.xlu0 %v1133, 120
    %v1149 = vpop.permute.xlu0 %1148
    %v1150 = vsel %vm229, %v1135, %v1137
    %v1151 = vsel %vm229, %v1139, %v1141
    %v1152 = vsel %vm229, %v1143, %v1145
    %v1153 = vsel %vm229, %v1147, %v1149
    %v1158 = vadd.f32 %v972, %v1150
    %v1159 = vadd.f32 %v973, %v1151
    %v1160 = vadd.f32 %v974, %v1152
    %v1161 = vadd.f32 %v975, %v1153
    %v1162 = vlaneseq
    %v1163 = vshrl.u32 %v1162, 7
    %v1164 = vsub.s32 0, %v1163
    %v1165 = vrot.slane %v53, %v1164
    %1167 = vrot.lane.b32.xlu0 %v1165, 12
    %v1168 = vpop.permute.xlu0 %1167
    %v1170 = vmul.f32 %v40, %v1168
    %v1171 = vmul.f32 %v41, %v1168
    %v1172 = vmul.f32 %v42, %v1168
    %v1173 = vmul.f32 %v43, %v1168
    %v1174 = vmul.f32 %v44, %v1168
    %v1175 = vmul.f32 %v45, %v1168
    %v1176 = vmul.f32 %v46, %v1168
    %v1177 = vmul.f32 %v47, %v1168
    %v1178 = vmul.f32 %v48, %v1168
    %v1179 = vmul.f32 %v49, %v1168
    %v1180 = vmul.f32 %v50, %v1168
    %v1181 = vmul.f32 %v51, %v1168
    %v1194 = vrot.slane %v1170, 2
    %v1195 = vrot.slane %v1172, 2
    %v1196 = vsel %vm474, %v1194, %v1195
    %v1197 = vrot.slane %v1171, 2
    %v1198 = vrot.slane %v1173, 2
    %v1199 = vsel %vm474, %v1197, %v1198
    %v1200 = vrot.slane %v1174, 2
    %v1201 = vsel %vm474, %v1195, %v1200
    %v1202 = vrot.slane %v1175, 2
    %v1203 = vsel %vm474, %v1198, %v1202
    %v1204 = vrot.slane %v1176, 2
    %v1205 = vrot.slane %v1178, 2
    %v1206 = vsel %vm474, %v1204, %v1205
    %v1207 = vrot.slane %v1177, 2
    %v1208 = vrot.slane %v1179, 2
    %v1209 = vsel %vm474, %v1207, %v1208
    %v1210 = vrot.slane %v1180, 2
    %v1211 = vsel %vm474, %v1205, %v1210
    %v1212 = vrot.slane %v1181, 2
    %v1213 = vsel %vm474, %v1208, %v1212
    %1214 = vrot.lane.b32.xlu0 %v1196, 120
    %v1215 = vpop.permute.xlu0 %1214
    %1216 = vrot.lane.b32.xlu0 %v1199, 120
    %v1217 = vpop.permute.xlu0 %1216
    %1218 = vrot.lane.b32.xlu0 %v1201, 120
    %v1219 = vpop.permute.xlu0 %1218
    %1220 = vrot.lane.b32.xlu0 %v1203, 120
    %v1221 = vpop.permute.xlu0 %1220
    %1222 = vrot.lane.b32.xlu0 %v1200, 120
    %v1223 = vpop.permute.xlu0 %1222
    %1224 = vrot.lane.b32.xlu0 %v1202, 120
    %v1225 = vpop.permute.xlu0 %1224
    %1226 = vrot.lane.b32.xlu0 %v1206, 120
    %v1227 = vpop.permute.xlu0 %1226
    %1228 = vrot.lane.b32.xlu0 %v1209, 120
    %v1229 = vpop.permute.xlu0 %1228
    %1230 = vrot.lane.b32.xlu0 %v1211, 120
    %v1231 = vpop.permute.xlu0 %1230
    %1232 = vrot.lane.b32.xlu0 %v1213, 120
    %v1233 = vpop.permute.xlu0 %1232
    %1234 = vrot.lane.b32.xlu0 %v1210, 120
    %v1235 = vpop.permute.xlu0 %1234
    %1236 = vrot.lane.b32.xlu0 %v1212, 120
    %v1237 = vpop.permute.xlu0 %1236
    %v1238 = vsel %vm229, %v1215, %v1217
    %v1239 = vsel %vm229, %v1219, %v1221
    %v1240 = vsel %vm229, %v1223, %v1225
    %v1241 = vsel %vm229, %v1227, %v1229
    %v1242 = vsel %vm229, %v1231, %v1233
    %v1243 = vsel %vm229, %v1235, %v1237
    %v1256 = vadd.f32 %v1070, %v1238
    %v1257 = vadd.f32 %v1071, %v1217
    %v1258 = vadd.f32 %v1072, %v1239
    %v1259 = vadd.f32 %v1073, %v1221
    %v1260 = vadd.f32 %v1074, %v1240
    %v1261 = vadd.f32 %v1075, %v1225
    %v1262 = vadd.f32 %v1076, %v1241
    %v1263 = vadd.f32 %v1077, %v1229
    %v1264 = vadd.f32 %v1078, %v1242
    %v1265 = vadd.f32 %v1079, %v1233
    %v1266 = vadd.f32 %v1080, %v1243
    %v1267 = vadd.f32 %v1081, %v1237
    %v1268 = vlaneseq
    %v1269 = vshrl.u32 %v1268, 7
    %v1270 = vsub.s32 0, %v1269
    %v1271 = vrot.slane %v55, %v1270
    %1273 = vrot.lane.b32.xlu0 %v1271, 16
    %v1274 = vpop.permute.xlu0 %1273
    %v1276 = vmul.f32 %v40, %v1274
    %v1277 = vmul.f32 %v41, %v1274
    %v1278 = vmul.f32 %v42, %v1274
    %v1279 = vmul.f32 %v43, %v1274
    %v1280 = vmul.f32 %v44, %v1274
    %v1281 = vmul.f32 %v45, %v1274
    %v1282 = vmul.f32 %v46, %v1274
    %v1283 = vmul.f32 %v47, %v1274
    %v1284 = vmul.f32 %v48, %v1274
    %v1285 = vmul.f32 %v49, %v1274
    %v1286 = vmul.f32 %v50, %v1274
    %v1287 = vmul.f32 %v51, %v1274
    %v1300 = vrot.slane %v1276, 4
    %v1301 = vrot.slane %v1278, 4
    %v1302 = vsel %vm957, %v1300, %v1301
    %v1303 = vrot.slane %v1277, 4
    %v1304 = vrot.slane %v1279, 4
    %v1305 = vsel %vm957, %v1303, %v1304
    %v1306 = vrot.slane %v1280, 4
    %v1307 = vsel %vm957, %v1301, %v1306
    %v1308 = vrot.slane %v1281, 4
    %v1309 = vsel %vm957, %v1304, %v1308
    %v1310 = vrot.slane %v1282, 4
    %v1311 = vrot.slane %v1284, 4
    %v1312 = vsel %vm957, %v1310, %v1311
    %v1313 = vrot.slane %v1283, 4
    %v1314 = vrot.slane %v1285, 4
    %v1315 = vsel %vm957, %v1313, %v1314
    %v1316 = vrot.slane %v1286, 4
    %v1317 = vsel %vm957, %v1311, %v1316
    %v1318 = vrot.slane %v1287, 4
    %v1319 = vsel %vm957, %v1314, %v1318
    %1320 = vrot.lane.b32.xlu0 %v1302, 112
    %v1321 = vpop.permute.xlu0 %1320
    %1322 = vrot.lane.b32.xlu0 %v1305, 112
    %v1323 = vpop.permute.xlu0 %1322
    %1324 = vrot.lane.b32.xlu0 %v1307, 112
    %v1325 = vpop.permute.xlu0 %1324
    %1326 = vrot.lane.b32.xlu0 %v1309, 112
    %v1327 = vpop.permute.xlu0 %1326
    %1328 = vrot.lane.b32.xlu0 %v1312, 112
    %v1329 = vpop.permute.xlu0 %1328
    %1330 = vrot.lane.b32.xlu0 %v1315, 112
    %v1331 = vpop.permute.xlu0 %1330
    %1332 = vrot.lane.b32.xlu0 %v1317, 112
    %v1333 = vpop.permute.xlu0 %1332
    %1334 = vrot.lane.b32.xlu0 %v1319, 112
    %v1335 = vpop.permute.xlu0 %1334
    %v1336 = vsel %vm368, %v1321, %v1323
    %v1337 = vsel %vm368, %v1325, %v1327
    %v1338 = vsel %vm368, %v1329, %v1331
    %v1339 = vsel %vm368, %v1333, %v1335
    %v1344 = vadd.f32 %v1158, %v1336
    %v1345 = vadd.f32 %v1159, %v1337
    %v1346 = vadd.f32 %v1160, %v1338
    %v1347 = vadd.f32 %v1161, %v1339
    %v1348 = vld [vmem:[%s3] sm:$0x1]
    %v1349 = vld [vmem:[%s4] sm:$0x1]
    %vm1350 = vcmask 1047585
    %v1351 = vsel %vm1350, %v1256, 0.0
    %v1352 = vsel %vm1350, %v1262, 0.0
    %v1353 = vadd.f32 %v1351, %v1352
    %vm1354 = vcmask 31745
    %v1355 = vsel %vm1354, %v1257, 0.0
    %v1356 = vsel %vm1354, %v1263, 0.0
    %v1357 = vadd.f32 %v1355, %v1356
    %vm1358 = vcmask 1047584
    %v1359 = vsel %vm1358, %v1258, 0.0
    %v1360 = vsel %vm1358, %v1264, 0.0
    %v1361 = vadd.f32 %v1359, %v1360
    %vm1362 = vcmask 31744
    %v1363 = vsel %vm1362, %v1259, 0.0
    %v1364 = vsel %vm1362, %v1265, 0.0
    %v1365 = vadd.f32 %v1363, %v1364
    %vm1366 = vcmask 1040416
    %v1367 = vsel %vm1366, %v1260, 0.0
    %v1368 = vsel %vm1366, %v1266, 0.0
    %v1369 = vadd.f32 %v1367, %v1368
    %vm1370 = vcmask 24576
    %v1371 = vsel %vm1370, %v1261, 0.0
    %v1372 = vsel %vm1370, %v1267, 0.0
    %v1373 = vadd.f32 %v1371, %v1372
    %v1380 = vrot.slane %v1353, 1
    %v1381 = vrot.slane %v1361, 1
    %v1382 = vsel %vm413, %v1380, %v1381
    %v1383 = vrot.slane %v1357, 1
    %v1384 = vrot.slane %v1365, 1
    %v1385 = vsel %vm413, %v1383, %v1384
    %v1386 = vrot.slane %v1369, 1
    %v1387 = vsel %vm413, %v1381, %v1386
    %v1388 = vrot.slane %v1373, 1
    %v1389 = vsel %vm413, %v1384, %v1388
    %v1394 = vsel %vm1358, %v1382, 0.0
    %v1395 = vsel %vm1358, %v1387, 0.0
    %v1396 = vadd.f32 %v1394, %v1395
    %v1397 = vrot.slane %v1396, 4
    %v1398 = vadd.f32 %v1396, %v1397
    %v1399 = vrot.slane %v1398, 2
    %v1400 = vadd.f32 %v1398, %v1399
    %v1401 = vrot.slane %v1400, 1
    %v1402 = vadd.f32 %v1400, %v1401
    %v1403 = vsel %vm1362, %v1385, 0.0
    %v1404 = vsel %vm1362, %v1389, 0.0
    %v1405 = vadd.f32 %v1403, %v1404
    %v1406 = vrot.slane %v1405, 4
    %v1407 = vadd.f32 %v1405, %v1406
    %v1408 = vrot.slane %v1407, 2
    %v1409 = vadd.f32 %v1407, %v1408
    %v1410 = vrot.slane %v1409, 1
    %v1411 = vadd.f32 %v1409, %v1410
    %1413 = vrot.lane.b32.xlu0 %v56, 4
    %v1414 = vpop.permute.xlu0 %1413
    %v1416 = vmul.f32 %v1402, %v1414
    %v1417 = vmul.f32 %v1411, %v1414
    %1420 = vrot.lane.b32.xlu0 %v1416, 124
    %v1421 = vpop.permute.xlu0 %1420
    %1422 = vrot.lane.b32.xlu0 %v1417, 124
    %v1423 = vpop.permute.xlu0 %1422
    %v1424 = vsel %vm158, %v1421, %v1423
    %vm1426 = vcmask 1040384
    %v1427 = vsel %vm1426, %v1424, 0.0
    %1428 = vadd.xlane.f32.xlu0 %v1427
    %v1429 = vpop.xlane.xlu0 %1428
    %v1430 = vmul.f32 %v1429, 0.001953125
    %v1431 = vmul.f32 %v1430, %v57
    %v1432 = vadd.f32 %v1431, 0.0
    %v1433 = vrot.slane %v56, 1
    %1434 = vrot.lane.b32.xlu0 %v1433, 4
    %v1435 = vpop.permute.xlu0 %1434
    %v1437 = vmul.f32 %v1402, %v1435
    %v1438 = vmul.f32 %v1411, %v1435
    %1441 = vrot.lane.b32.xlu0 %v1437, 124
    %v1442 = vpop.permute.xlu0 %1441
    %1443 = vrot.lane.b32.xlu0 %v1438, 124
    %v1444 = vpop.permute.xlu0 %1443
    %v1445 = vsel %vm158, %v1442, %v1444
    %v1447 = vsel %vm1426, %v1445, 0.0
    %1448 = vadd.xlane.f32.xlu0 %v1447
    %v1449 = vpop.xlane.xlu0 %1448
    %v1450 = vmul.f32 %v1449, 0.001953125
    %v1452 = vrot.slane %v57, 1
    %v1454 = vmul.f32 %v1450, %v1452
    %v1455 = vadd.f32 %v1432, %v1454
    %v1456 = vrot.slane %v56, 2
    %1457 = vrot.lane.b32.xlu0 %v1456, 4
    %v1458 = vpop.permute.xlu0 %1457
    %v1460 = vmul.f32 %v1402, %v1458
    %v1461 = vmul.f32 %v1411, %v1458
    %1464 = vrot.lane.b32.xlu0 %v1460, 124
    %v1465 = vpop.permute.xlu0 %1464
    %1466 = vrot.lane.b32.xlu0 %v1461, 124
    %v1467 = vpop.permute.xlu0 %1466
    %v1468 = vsel %vm158, %v1465, %v1467
    %v1470 = vsel %vm1426, %v1468, 0.0
    %1471 = vadd.xlane.f32.xlu0 %v1470
    %v1472 = vpop.xlane.xlu0 %1471
    %v1473 = vmul.f32 %v1472, 0.001953125
    %v1474 = vrot.slane %v57, 2
    %v1476 = vmul.f32 %v1473, %v1474
    %v1477 = vadd.f32 %v1455, %v1476
    %v1478 = vrot.slane %v56, 3
    %1479 = vrot.lane.b32.xlu0 %v1478, 4
    %v1480 = vpop.permute.xlu0 %1479
    %v1482 = vmul.f32 %v1402, %v1480
    %v1483 = vmul.f32 %v1411, %v1480
    %1486 = vrot.lane.b32.xlu0 %v1482, 124
    %v1487 = vpop.permute.xlu0 %1486
    %1488 = vrot.lane.b32.xlu0 %v1483, 124
    %v1489 = vpop.permute.xlu0 %1488
    %v1490 = vsel %vm158, %v1487, %v1489
    %v1492 = vsel %vm1426, %v1490, 0.0
    %1493 = vadd.xlane.f32.xlu0 %v1492
    %v1494 = vpop.xlane.xlu0 %1493
    %v1495 = vmul.f32 %v1494, 0.001953125
    %v1496 = vrot.slane %v57, 3
    %v1498 = vmul.f32 %v1495, %v1496
    %v1499 = vadd.f32 %v1477, %v1498
    %v1500 = vlaneseq
    %v1501 = vshrl.u32 %v1500, 7
    %v1502 = vsub.s32 0, %v1501
    %v1503 = vrot.slane %v1499, %v1502
    %1505 = vrot.lane.b32.xlu0 %v1503, 4
    %v1506 = vpop.permute.xlu0 %1505
    %v1508 = vsub.f32 %v1256, %v1506
    %v1509 = vsub.f32 %v1257, %v1506
    %v1510 = vsub.f32 %v1258, %v1506
    %v1511 = vsub.f32 %v1259, %v1506
    %v1512 = vsub.f32 %v1260, %v1506
    %v1513 = vsub.f32 %v1261, %v1506
    %v1514 = vsub.f32 %v1262, %v1506
    %v1515 = vsub.f32 %v1263, %v1506
    %v1516 = vsub.f32 %v1264, %v1506
    %v1517 = vsub.f32 %v1265, %v1506
    %v1518 = vsub.f32 %v1266, %v1506
    %v1519 = vsub.f32 %v1267, %v1506
    %v1520 = vmul.f32 %v1508, %v1508
    %v1521 = vmul.f32 %v1509, %v1509
    %v1522 = vmul.f32 %v1510, %v1510
    %v1523 = vmul.f32 %v1511, %v1511
    %v1524 = vmul.f32 %v1512, %v1512
    %v1525 = vmul.f32 %v1513, %v1513
    %v1526 = vmul.f32 %v1514, %v1514
    %v1527 = vmul.f32 %v1515, %v1515
    %v1528 = vmul.f32 %v1516, %v1516
    %v1529 = vmul.f32 %v1517, %v1517
    %v1530 = vmul.f32 %v1518, %v1518
    %v1531 = vmul.f32 %v1519, %v1519
    %v1532 = vsel %vm1350, %v1520, 0.0
    %v1533 = vsel %vm1350, %v1526, 0.0
    %v1534 = vadd.f32 %v1532, %v1533
    %v1535 = vsel %vm1354, %v1521, 0.0
    %v1536 = vsel %vm1354, %v1527, 0.0
    %v1537 = vadd.f32 %v1535, %v1536
    %v1538 = vsel %vm1358, %v1522, 0.0
    %v1539 = vsel %vm1358, %v1528, 0.0
    %v1540 = vadd.f32 %v1538, %v1539
    %v1541 = vsel %vm1362, %v1523, 0.0
    %v1542 = vsel %vm1362, %v1529, 0.0
    %v1543 = vadd.f32 %v1541, %v1542
    %v1544 = vsel %vm1366, %v1524, 0.0
    %v1545 = vsel %vm1366, %v1530, 0.0
    %v1546 = vadd.f32 %v1544, %v1545
    %v1547 = vsel %vm1370, %v1525, 0.0
    %v1548 = vsel %vm1370, %v1531, 0.0
    %v1549 = vadd.f32 %v1547, %v1548
    %v1556 = vrot.slane %v1534, 1
    %v1557 = vrot.slane %v1540, 1
    %v1558 = vsel %vm413, %v1556, %v1557
    %v1559 = vrot.slane %v1537, 1
    %v1560 = vrot.slane %v1543, 1
    %v1561 = vsel %vm413, %v1559, %v1560
    %v1562 = vrot.slane %v1546, 1
    %v1563 = vsel %vm413, %v1557, %v1562
    %v1564 = vrot.slane %v1549, 1
    %v1565 = vsel %vm413, %v1560, %v1564
    %v1570 = vsel %vm1358, %v1558, 0.0
    %v1571 = vsel %vm1358, %v1563, 0.0
    %v1572 = vadd.f32 %v1570, %v1571
    %v1573 = vrot.slane %v1572, 4
    %v1574 = vadd.f32 %v1572, %v1573
    %v1575 = vrot.slane %v1574, 2
    %v1576 = vadd.f32 %v1574, %v1575
    %v1577 = vrot.slane %v1576, 1
    %v1578 = vadd.f32 %v1576, %v1577
    %v1579 = vsel %vm1362, %v1561, 0.0
    %v1580 = vsel %vm1362, %v1565, 0.0
    %v1581 = vadd.f32 %v1579, %v1580
    %v1582 = vrot.slane %v1581, 4
    %v1583 = vadd.f32 %v1581, %v1582
    %v1584 = vrot.slane %v1583, 2
    %v1585 = vadd.f32 %v1583, %v1584
    %v1586 = vrot.slane %v1585, 1
    %v1587 = vadd.f32 %v1585, %v1586
    %v1588 = vmul.f32 %v1578, %v1414
    %v1589 = vmul.f32 %v1587, %v1414
    %1592 = vrot.lane.b32.xlu0 %v1588, 124
    %v1593 = vpop.permute.xlu0 %1592
    %1594 = vrot.lane.b32.xlu0 %v1589, 124
    %v1595 = vpop.permute.xlu0 %1594
    %v1596 = vsel %vm158, %v1593, %v1595
    %v1598 = vsel %vm1426, %v1596, 0.0
    %1599 = vadd.xlane.f32.xlu0 %v1598
    %v1600 = vpop.xlane.xlu0 %1599
    %v1601 = vmul.f32 %v1600, 0.001953125
    %v1602 = vadd.f32 %v1601, 0.001
    %v1603 = vrsqrt.pop %v1602
    %v1604 = vmul.f32 %v1348, %v1603
    %1606 = vset.pattern.permute.xlu0 0
    %1607 = vperm.xlu0 %1606, %v1604
    %v1608 = vpop.permute.xlu0 %1607
    %v1610 = vlaneseq
    %v1611 = vshrl.u32 %v1610, 7
    %v1612 = vsub.s32 0, %v1611
    %v1613 = vrot.slane %v1608, %v1612
    %v1614 = vmul.f32 %v1613, %v57
    %v1615 = vadd.f32 %v1614, 0.0
    %v1616 = vmul.f32 %v1578, %v1435
    %v1617 = vmul.f32 %v1587, %v1435
    %1620 = vrot.lane.b32.xlu0 %v1616, 124
    %v1621 = vpop.permute.xlu0 %1620
    %1622 = vrot.lane.b32.xlu0 %v1617, 124
    %v1623 = vpop.permute.xlu0 %1622
    %v1624 = vsel %vm158, %v1621, %v1623
    %v1626 = vsel %vm1426, %v1624, 0.0
    %1627 = vadd.xlane.f32.xlu0 %v1626
    %v1628 = vpop.xlane.xlu0 %1627
    %v1629 = vmul.f32 %v1628, 0.001953125
    %v1630 = vadd.f32 %v1629, 0.001
    %v1631 = vrsqrt.pop %v1630
    %v1632 = vmul.f32 %v1348, %v1631
    %1634 = vset.pattern.permute.xlu0 1
    %1635 = vperm.xlu0 %1634, %v1632
    %v1636 = vpop.permute.xlu0 %1635
    %v1638 = vlaneseq
    %v1639 = vshrl.u32 %v1638, 7
    %v1640 = vsub.s32 0, %v1639
    %v1641 = vrot.slane %v1636, %v1640
    %v1642 = vmul.f32 %v1641, %v57
    %v1644 = vrot.slane %v1642, 1
    %v1646 = vadd.f32 %v1615, %v1644
    %v1647 = vmul.f32 %v1578, %v1458
    %v1648 = vmul.f32 %v1587, %v1458
    %1651 = vrot.lane.b32.xlu0 %v1647, 124
    %v1652 = vpop.permute.xlu0 %1651
    %1653 = vrot.lane.b32.xlu0 %v1648, 124
    %v1654 = vpop.permute.xlu0 %1653
    %v1655 = vsel %vm158, %v1652, %v1654
    %v1657 = vsel %vm1426, %v1655, 0.0
    %1658 = vadd.xlane.f32.xlu0 %v1657
    %v1659 = vpop.xlane.xlu0 %1658
    %v1660 = vmul.f32 %v1659, 0.001953125
    %v1661 = vadd.f32 %v1660, 0.001
    %v1662 = vrsqrt.pop %v1661
    %v1663 = vmul.f32 %v1348, %v1662
    %1665 = vset.pattern.permute.xlu0 2
    %1666 = vperm.xlu0 %1665, %v1663
    %v1667 = vpop.permute.xlu0 %1666
    %v1669 = vlaneseq
    %v1670 = vshrl.u32 %v1669, 7
    %v1671 = vsub.s32 0, %v1670
    %v1672 = vrot.slane %v1667, %v1671
    %v1673 = vmul.f32 %v1672, %v57
    %v1675 = vrot.slane %v1673, 2
    %v1677 = vadd.f32 %v1646, %v1675
    %v1678 = vmul.f32 %v1578, %v1480
    %v1679 = vmul.f32 %v1587, %v1480
    %1682 = vrot.lane.b32.xlu0 %v1678, 124
    %v1683 = vpop.permute.xlu0 %1682
    %1684 = vrot.lane.b32.xlu0 %v1679, 124
    %v1685 = vpop.permute.xlu0 %1684
    %v1686 = vsel %vm158, %v1683, %v1685
    %v1688 = vsel %vm1426, %v1686, 0.0
    %1689 = vadd.xlane.f32.xlu0 %v1688
    %v1690 = vpop.xlane.xlu0 %1689
    %v1691 = vmul.f32 %v1690, 0.001953125
    %v1692 = vadd.f32 %v1691, 0.001
    %v1693 = vrsqrt.pop %v1692
    %v1694 = vmul.f32 %v1348, %v1693
    %1696 = vset.pattern.permute.xlu0 3
    %1697 = vperm.xlu0 %1696, %v1694
    %v1698 = vpop.permute.xlu0 %1697
    %v1700 = vlaneseq
    %v1701 = vshrl.u32 %v1700, 7
    %v1702 = vsub.s32 0, %v1701
    %v1703 = vrot.slane %v1698, %v1702
    %v1704 = vmul.f32 %v1703, %v57
    %v1706 = vrot.slane %v1704, 3
    %v1708 = vadd.f32 %v1677, %v1706
    %v1709 = vlaneseq
    %v1710 = vshrl.u32 %v1709, 7
    %v1711 = vsub.s32 0, %v1710
    %v1712 = vrot.slane %v1708, %v1711
    %1714 = vrot.lane.b32.xlu0 %v1712, 4
    %v1715 = vpop.permute.xlu0 %1714
    %v1717 = vmul.f32 %v1508, %v1715
    %v1718 = vmul.f32 %v1509, %v1715
    %v1719 = vmul.f32 %v1510, %v1715
    %v1720 = vmul.f32 %v1511, %v1715
    %v1721 = vmul.f32 %v1512, %v1715
    %v1722 = vmul.f32 %v1513, %v1715
    %v1723 = vmul.f32 %v1514, %v1715
    %v1724 = vmul.f32 %v1515, %v1715
    %v1725 = vmul.f32 %v1516, %v1715
    %v1726 = vmul.f32 %v1517, %v1715
    %v1727 = vmul.f32 %v1518, %v1715
    %v1728 = vmul.f32 %v1519, %v1715
    %v1730 = vlaneseq
    %v1731 = vshrl.u32 %v1730, 7
    %v1732 = vsub.s32 0, %v1731
    %v1733 = vrot.slane %v1349, %v1732
    %1734 = vrot.lane.b32.xlu0 %v1733, 4
    %v1735 = vpop.permute.xlu0 %1734
    %v1737 = vadd.f32 %v1717, %v1735
    %v1738 = vadd.f32 %v1718, %v1735
    %v1739 = vadd.f32 %v1719, %v1735
    %v1740 = vadd.f32 %v1720, %v1735
    %v1741 = vadd.f32 %v1721, %v1735
    %v1742 = vadd.f32 %v1722, %v1735
    %v1743 = vadd.f32 %v1723, %v1735
    %v1744 = vadd.f32 %v1724, %v1735
    %v1745 = vadd.f32 %v1725, %v1735
    %v1746 = vadd.f32 %v1726, %v1735
    %v1747 = vadd.f32 %v1727, %v1735
    %v1748 = vadd.f32 %v1728, %v1735
    %v1749 = vmax.f32 %v1737, 0.0
    %v1750 = vmax.f32 %v1738, 0.0
    %v1751 = vmax.f32 %v1739, 0.0
    %v1752 = vmax.f32 %v1740, 0.0
    %v1753 = vmax.f32 %v1741, 0.0
    %v1754 = vmax.f32 %v1742, 0.0
    %v1755 = vmax.f32 %v1743, 0.0
    %v1756 = vmax.f32 %v1744, 0.0
    %v1757 = vmax.f32 %v1745, 0.0
    %v1758 = vmax.f32 %v1746, 0.0
    %v1759 = vmax.f32 %v1747, 0.0
    %v1760 = vmax.f32 %v1748, 0.0
    %v1761 = vld [vmem:[%s5] sm:$0x1]
    %v1762 = vld [vmem:[%s6] sm:$0x1]
    %v1763 = vadd.f32 %v1344, %v1346
    %v1764 = vadd.f32 %v1345, %v1347
    %v1765 = vadd.f32 %v1763, %v1764
    %v1766 = vrot.slane %v1765, 4
    %v1767 = vadd.f32 %v1765, %v1766
    %v1768 = vrot.slane %v1767, 2
    %v1769 = vadd.f32 %v1767, %v1768
    %v1770 = vrot.slane %v1769, 1
    %v1771 = vadd.f32 %v1769, %v1770
    %v1772 = vmul.f32 %v1771, %v56
    %v1773 = vsel %vm1426, %v1772, 0.0
    %1774 = vadd.xlane.f32.xlu0 %v1773
    %v1775 = vpop.xlane.xlu0 %1774
    %v1776 = vmul.f32 %v1775, 0.001953125
    %v1777 = vmul.f32 %v1776, %v57
    %v1778 = vadd.f32 %v1777, 0.0
    %vm1779 = vcmask 1041409
    %v1780 = vsel %vm1779, %v1772, 0.0
    %1781 = vadd.xlane.f32.xlu0 %v1780
    %v1782 = vpop.xlane.xlu0 %1781
    %v1783 = vmul.f32 %v1782, 0.001953125
    %v1784 = vmul.f32 %v1783, %v57
    %v1786 = vrot.slane %v1784, 1
    %v1788 = vadd.f32 %v1778, %v1786
    %vm1789 = vcmask 1042434
    %v1790 = vsel %vm1789, %v1772, 0.0
    %1791 = vadd.xlane.f32.xlu0 %v1790
    %v1792 = vpop.xlane.xlu0 %1791
    %v1793 = vmul.f32 %v1792, 0.001953125
    %v1794 = vmul.f32 %v1793, %v57
    %v1796 = vrot.slane %v1794, 2
    %v1798 = vadd.f32 %v1788, %v1796
    %vm1799 = vcmask 1043459
    %v1800 = vsel %vm1799, %v1772, 0.0
    %1801 = vadd.xlane.f32.xlu0 %v1800
    %v1802 = vpop.xlane.xlu0 %1801
    %v1803 = vmul.f32 %v1802, 0.001953125
    %v1804 = vmul.f32 %v1803, %v57
    %v1806 = vrot.slane %v1804, 3
    %v1808 = vadd.f32 %v1798, %v1806
    %v1809 = vlaneseq
    %v1810 = vshrl.u32 %v1809, 7
    %v1811 = vsub.s32 0, %v1810
    %v1812 = vrot.slane %v1808, %v1811
    %v1813 = vsub.f32 %v1344, %v1812
    %v1814 = vsub.f32 %v1345, %v1812
    %v1815 = vsub.f32 %v1346, %v1812
    %v1816 = vsub.f32 %v1347, %v1812
    %v1817 = vmul.f32 %v1813, %v1813
    %v1818 = vmul.f32 %v1814, %v1814
    %v1819 = vmul.f32 %v1815, %v1815
    %v1820 = vmul.f32 %v1816, %v1816
    %v1821 = vadd.f32 %v1817, %v1819
    %v1822 = vadd.f32 %v1818, %v1820
    %v1823 = vadd.f32 %v1821, %v1822
    %v1824 = vrot.slane %v1823, 4
    %v1825 = vadd.f32 %v1823, %v1824
    %v1826 = vrot.slane %v1825, 2
    %v1827 = vadd.f32 %v1825, %v1826
    %v1828 = vrot.slane %v1827, 1
    %v1829 = vadd.f32 %v1827, %v1828
    %v1830 = vmul.f32 %v1829, %v56
    %v1831 = vsel %vm1426, %v1830, 0.0
    %1832 = vadd.xlane.f32.xlu0 %v1831
    %v1833 = vpop.xlane.xlu0 %1832
    %v1834 = vmul.f32 %v1833, 0.001953125
    %v1835 = vadd.f32 %v1834, 0.001
    %v1836 = vrsqrt.pop %v1835
    %v1837 = vmul.f32 %v1761, %v1836
    %1839 = vset.pattern.permute.xlu0 0
    %1840 = vperm.xlu0 %1839, %v1837
    %v1841 = vpop.permute.xlu0 %1840
    %v1843 = vlaneseq
    %v1844 = vshrl.u32 %v1843, 7
    %v1845 = vsub.s32 0, %v1844
    %v1846 = vrot.slane %v1841, %v1845
    %v1847 = vmul.f32 %v1846, %v57
    %v1848 = vadd.f32 %v1847, 0.0
    %v1849 = vsel %vm1779, %v1830, 0.0
    %1850 = vadd.xlane.f32.xlu0 %v1849
    %v1851 = vpop.xlane.xlu0 %1850
    %v1852 = vmul.f32 %v1851, 0.001953125
    %v1853 = vadd.f32 %v1852, 0.001
    %v1854 = vrsqrt.pop %v1853
    %v1856 = vlaneseq
    %v1857 = vshrl.u32 %v1856, 7
    %v1858 = vsub.s32 1, %v1857
    %v1859 = vrot.slane %v1854, %v1858
    %v1861 = vmul.f32 %v1761, %v1859
    %1863 = vset.pattern.permute.xlu0 1
    %1864 = vperm.xlu0 %1863, %v1861
    %v1865 = vpop.permute.xlu0 %1864
    %v1867 = vlaneseq
    %v1868 = vshrl.u32 %v1867, 7
    %v1869 = vsub.s32 0, %v1868
    %v1870 = vrot.slane %v1865, %v1869
    %v1871 = vmul.f32 %v1870, %v57
    %v1873 = vrot.slane %v1871, 1
    %v1875 = vadd.f32 %v1848, %v1873
    %v1876 = vsel %vm1789, %v1830, 0.0
    %1877 = vadd.xlane.f32.xlu0 %v1876
    %v1878 = vpop.xlane.xlu0 %1877
    %v1879 = vmul.f32 %v1878, 0.001953125
    %v1880 = vadd.f32 %v1879, 0.001
    %v1881 = vrsqrt.pop %v1880
    %v1883 = vlaneseq
    %v1884 = vshrl.u32 %v1883, 7
    %v1885 = vsub.s32 2, %v1884
    %v1886 = vrot.slane %v1881, %v1885
    %v1888 = vmul.f32 %v1761, %v1886
    %1890 = vset.pattern.permute.xlu0 2
    %1891 = vperm.xlu0 %1890, %v1888
    %v1892 = vpop.permute.xlu0 %1891
    %v1894 = vlaneseq
    %v1895 = vshrl.u32 %v1894, 7
    %v1896 = vsub.s32 0, %v1895
    %v1897 = vrot.slane %v1892, %v1896
    %v1898 = vmul.f32 %v1897, %v57
    %v1900 = vrot.slane %v1898, 2
    %v1902 = vadd.f32 %v1875, %v1900
    %v1903 = vsel %vm1799, %v1830, 0.0
    %1904 = vadd.xlane.f32.xlu0 %v1903
    %v1905 = vpop.xlane.xlu0 %1904
    %v1906 = vmul.f32 %v1905, 0.001953125
    %v1907 = vadd.f32 %v1906, 0.001
    %v1908 = vrsqrt.pop %v1907
    %v1910 = vlaneseq
    %v1911 = vshrl.u32 %v1910, 7
    %v1912 = vsub.s32 3, %v1911
    %v1913 = vrot.slane %v1908, %v1912
    %v1915 = vmul.f32 %v1761, %v1913
    %1917 = vset.pattern.permute.xlu0 3
    %1918 = vperm.xlu0 %1917, %v1915
    %v1919 = vpop.permute.xlu0 %1918
    %v1921 = vlaneseq
    %v1922 = vshrl.u32 %v1921, 7
    %v1923 = vsub.s32 0, %v1922
    %v1924 = vrot.slane %v1919, %v1923
    %v1925 = vmul.f32 %v1924, %v57
    %v1927 = vrot.slane %v1925, 3
    %v1929 = vadd.f32 %v1902, %v1927
    %v1930 = vlaneseq
    %v1931 = vshrl.u32 %v1930, 7
    %v1932 = vsub.s32 0, %v1931
    %v1933 = vrot.slane %v1929, %v1932
    %v1934 = vmul.f32 %v1813, %v1933
    %v1935 = vmul.f32 %v1814, %v1933
    %v1936 = vmul.f32 %v1815, %v1933
    %v1937 = vmul.f32 %v1816, %v1933
    %v1939 = vlaneseq
    %v1940 = vshrl.u32 %v1939, 7
    %v1941 = vsub.s32 0, %v1940
    %v1942 = vrot.slane %v1762, %v1941
    %v1944 = vadd.f32 %v1934, %v1942
    %v1945 = vadd.f32 %v1935, %v1942
    %v1946 = vadd.f32 %v1936, %v1942
    %v1947 = vadd.f32 %v1937, %v1942
    %v1948 = vmax.f32 %v1944, 0.0
    %v1949 = vmax.f32 %v1945, 0.0
    %v1950 = vmax.f32 %v1946, 0.0
    %v1951 = vmax.f32 %v1947, 0.0
    %v1956 = vrot.slane %v1948, 7
    %v1957 = vrot.slane %v1949, 7
    %v1958 = vsel %vm1426, %v1956, %v1957
    %v1959 = vrot.slane %v1950, 7
    %v1960 = vrot.slane %v1951, 7
    %v1961 = vsel %vm1426, %v1959, %v1960
    %1962 = vrot.lane.b32.xlu0 %v1956, 4
    %v1963 = vpop.permute.xlu0 %1962
    %1964 = vrot.lane.b32.xlu0 %v1958, 4
    %v1965 = vpop.permute.xlu0 %1964
    %1966 = vrot.lane.b32.xlu0 %v1957, 4
    %v1967 = vpop.permute.xlu0 %1966
    %1968 = vrot.lane.b32.xlu0 %v1959, 4
    %v1969 = vpop.permute.xlu0 %1968
    %1970 = vrot.lane.b32.xlu0 %v1961, 4
    %v1971 = vpop.permute.xlu0 %1970
    %1972 = vrot.lane.b32.xlu0 %v1960, 4
    %v1973 = vpop.permute.xlu0 %1972
    %v1980 = vadd.f32 %v1749, %v1963
    %v1981 = vadd.f32 %v1750, %v1963
    %v1982 = vadd.f32 %v1751, %v1965
    %v1983 = vadd.f32 %v1752, %v1965
    %v1984 = vadd.f32 %v1753, %v1967
    %v1985 = vadd.f32 %v1754, %v1967
    %v1986 = vadd.f32 %v1755, %v1969
    %v1987 = vadd.f32 %v1756, %v1969
    %v1988 = vadd.f32 %v1757, %v1971
    %v1989 = vadd.f32 %v1758, %v1971
    %v1990 = vadd.f32 %v1759, %v1973
    %v1991 = vadd.f32 %v1760, %v1973
    %v2004 = vrot.slane %v1980, 1
    %v2005 = vrot.slane %v1982, 1
    %v2006 = vsel %vm413, %v2004, %v2005
    %v2007 = vrot.slane %v1981, 1
    %v2008 = vrot.slane %v1983, 1
    %v2009 = vsel %vm413, %v2007, %v2008
    %v2010 = vrot.slane %v1984, 1
    %v2011 = vsel %vm413, %v2005, %v2010
    %v2012 = vrot.slane %v1985, 1
    %v2013 = vsel %vm413, %v2008, %v2012
    %v2014 = vrot.slane %v1986, 1
    %v2015 = vrot.slane %v1988, 1
    %v2016 = vsel %vm413, %v2014, %v2015
    %v2017 = vrot.slane %v1987, 1
    %v2018 = vrot.slane %v1989, 1
    %v2019 = vsel %vm413, %v2017, %v2018
    %v2020 = vrot.slane %v1990, 1
    %v2021 = vsel %vm413, %v2015, %v2020
    %v2022 = vrot.slane %v1991, 1
    %v2023 = vsel %vm413, %v2018, %v2022
    %v2032 = vpack.c.bf16 %v2011, %v2006
    %v2033 = vpack.c.bf16 %v2013, %v2009
    %v2034 = vpack.c.bf16 %v2021, %v2016
    %v2035 = vpack.c.bf16 %v2023, %v2019
    %v2036 = vld [vmem:[%s9] sm:$0xf]
    %v2037 = vld [vmem:[%s9 + $0x4] sm:$0xf]
    %v2038 = vld [vmem:[%s9 + $0x8] sm:$0xf]
    %v2039 = vld [vmem:[%s9 + $0xc] sm:$0xf]
    %v2040 = vld [vmem:[%s9 + $0x10] sm:$0xf]
    %v2041 = vld [vmem:[%s9 + $0x14] sm:$0xf]
    %v2042 = vld [vmem:[%s9 + $0x18] sm:$0xf]
    %v2043 = vld [vmem:[%s9 + $0x1c] sm:$0xf]
    %v2044 = vld [vmem:[%s9 + $0x20] sm:$0xf]
    %v2045 = vld [vmem:[%s9 + $0x24] sm:$0xf]
    %v2046 = vld [vmem:[%s9 + $0x28] sm:$0xf]
    %v2047 = vld [vmem:[%s9 + $0x2c] sm:$0xf]
    %v2048 = vld [vmem:[%s9 + $0x30] sm:$0xf]
    %v2049 = vld [vmem:[%s9 + $0x34] sm:$0xf]
    %v2050 = vld [vmem:[%s9 + $0x38] sm:$0xf]
    %v2051 = vld [vmem:[%s9 + $0x3c] sm:$0xf]
    %v2052 = vld [vmem:[%s10] sm:$0x1]
    %v2054 = vlaneseq
    %v2055 = vshrl.u32 %v2054, 7
    %v2056 = vsub.s32 0, %v2055
    %v2057 = vrot.slane %v2052, %v2056
    %2063 = vrot.lane.b32.xlu0 %v2032, 124
    %v2064 = vpop.permute.xlu0 %2063
    %2065 = vrot.lane.b32.xlu0 %v2033, 124
    %v2066 = vpop.permute.xlu0 %2065
    %2067 = vrot.lane.b32.xlu0 %v2034, 124
    %v2068 = vpop.permute.xlu0 %2067
    %2069 = vrot.lane.b32.xlu0 %v2035, 124
    %v2070 = vpop.permute.xlu0 %2069
    %vm2071 = vcmask 1014784
    %v2072 = vsel %vm2071, %v2064, %v2066
    %v2073 = vsel %vm2071, %v2068, %v2070
    %v2092 = vunpack.c.l.b16 %v2036
    %v2093 = vunpack.c.l.b16 %v2037
    %v2094 = vunpack.c.l.b16 %v2038
    %v2095 = vunpack.c.l.b16 %v2039
    %v2096 = vunpack.c.l.b16 %v2040
    %v2097 = vunpack.c.l.b16 %v2041
    %v2098 = vunpack.c.l.b16 %v2042
    %v2099 = vunpack.c.l.b16 %v2043
    %v2100 = vunpack.c.l.b16 %v2044
    %v2101 = vunpack.c.l.b16 %v2045
    %v2102 = vunpack.c.l.b16 %v2046
    %v2103 = vunpack.c.l.b16 %v2047
    %v2104 = vunpack.c.l.b16 %v2048
    %v2105 = vunpack.c.l.b16 %v2049
    %v2106 = vunpack.c.l.b16 %v2050
    %v2107 = vunpack.c.l.b16 %v2051
    %v2108 = vpack.c.b16 %v2093, %v2092
    %v2109 = vpack.c.b16 %v2095, %v2094
    %v2110 = vpack.c.b16 %v2097, %v2096
    %v2111 = vpack.c.b16 %v2099, %v2098
    %v2112 = vpack.c.b16 %v2101, %v2100
    %v2113 = vpack.c.b16 %v2103, %v2102
    %v2114 = vpack.c.b16 %v2105, %v2104
    %v2115 = vpack.c.b16 %v2107, %v2106
    %2124 = vmatprep.subr.bf16.mxu0 0
    %2125 = vmatpush1.bf16.msra.mxu0 %v2108
    %2126 = vmatprep.subr.bf16.mxu0 0
    %2127 = vmatpush1.bf16.msra.mxu0 %v2109
    %2128 = vmatprep.subr.bf16.mxu0 0
    %2129 = vmatpush1.bf16.msra.mxu0 %v2110
    %2130 = vmatprep.subr.bf16.mxu0 0
    %2131 = vmatpush1.bf16.msra.mxu0 %v2111
    %2132 = vmatprep.subr.bf16.mxu0 0
    %2133 = vmatpush1.bf16.msra.mxu0 %v2112
    %2134 = vmatprep.subr.bf16.mxu0 0
    %2135 = vmatpush1.bf16.msra.mxu0 %v2113
    %2136 = vmatprep.subr.bf16.mxu0 0
    %2137 = vmatpush1.bf16.msra.mxu0 %v2114
    %2138 = vmatprep.subr.bf16.mxu0 0
    %2139 = vmatpush1.bf16.msra.mxu0 %v2115
    %2140 = vmatprep.subr.bf16.mxu0 0
    %2141 = vmatpush1.bf16.msra.mxu0 0
    %2142 = vmatprep.subr.bf16.mxu0 0
    %2143 = vmatpush1.bf16.msra.mxu0 0
    %2144 = vmatprep.subr.bf16.mxu0 0
    %2145 = vmatpush1.bf16.msra.mxu0 0
    %2146 = vmatprep.subr.bf16.mxu0 0
    %2147 = vmatpush1.bf16.msra.mxu0 0
    %2148 = vmatprep.subr.bf16.mxu0 0
    %2149 = vmatpush1.bf16.msra.mxu0 0
    %2150 = vmatprep.subr.bf16.mxu0 0
    %2151 = vmatpush1.bf16.msra.mxu0 0
    %2152 = vmatprep.subr.bf16.mxu0 0
    %2153 = vmatpush1.bf16.msra.mxu0 0
    %2154 = vmatprep.subr.bf16.mxu0 0
    %2155 = vmatpush1.bf16.msra.mxu0 0
    %2156 = vmatprep.mubr.bf16.mxu0 0
    %2157 = vmatmul.mubr.bf16.gmra.mrb[0].mxu0 %v2072
    %v2158 = vpop.f32.mrb[0].mxu0
    %v2159 = vadd.f32 %v2057, %v2158
    %v2160 = vpop.f32.mrb[0].mxu0
    %v2161 = vpop.f32.mrb[0].mxu0
    %v2162 = vadd.f32 %v2057, %v2161
    %v2163 = vpop.f32.mrb[0].mxu0
    %2164 = vmatprep.mubr.bf16.mxu0 0
    %2165 = vmatmul.mubr.bf16.gmra.mrb[0].mxu0 %v2073
    %v2166 = vpop.f32.mrb[0].mxu0
    %v2167 = vadd.f32 %v2057, %v2166
    %v2168 = vpop.f32.mrb[0].mxu0
    %v2169 = vpop.f32.mrb[0].mxu0
    %v2170 = vadd.f32 %v2057, %v2169
    %v2171 = vpop.f32.mrb[0].mxu0
    %2172 = vdwg.mxu0
    %2173 = vst [vmem:[#allocation2] sm:$0xff] %v2159
    %2174 = vst [vmem:[#allocation2 + $0x8] sm:$0xff] %v2162
    %2175 = vst [vmem:[#allocation2 + $0x10] sm:$0xff] %v2167
    %2176 = vst [vmem:[#allocation2 + $0x18] sm:$0xff] %v2170
    // Predicated region
    $region46: #{tpu_custom_call.1} parent=1 // pred_check
      _
    $region47: #{tpu_custom_call.1} parent=1 // pred_check_branch
      %2178 = sbr.rel (0) target = $region49
    $region48: #{tpu_custom_call.1} parent=1 // pred_region
      %s2180 = ssub.s32 512, 512
      %2181 = vsyncadd [#allocation3], %s2180
      %s2182 = sshll.u32 [#allocation2], 4
      %s2183 = int_to_ptr.vmem [resolvable:$true] %s2182
      %2188 = dma.vmem_to_hbm [thread:$0]  %s2183, 512, %s11, [#allocation3], 128, 128, 8
    $region49: #{tpu_custom_call.1} parent=1 // pred_fallthru
      _
    // Predicated region
    $region50: #{tpu_custom_call.1} parent=1 // pred_check
      _
    $region51: #{tpu_custom_call.1} parent=1 // pred_check_branch
      %2190 = sbr.rel (0) target = $region53
    $region52: #{tpu_custom_call.1} parent=1 // pred_region
      %2191 = dma.done [#allocation3], 512
    $region53: #{tpu_custom_call.1} parent=1 // pred_fallthru
      _
    %2192 = vsyncpa [#allocation3], 1

</llo_original>
